<compile_context>
chip_gen: v7x
topology: tpu7x:2x2x1
jax: 0.10.0
libtpu: 0.0.40
codegen_flags: <defaults>
</compile_context>

<pallas_src>
import functools

import jax
import jax.numpy as jnp
from jax.experimental import pallas as pl
from jax.experimental.pallas import tpu as pltpu


def _round_up(x, m):
    return ((x + m - 1) // m) * m


# ---------------------------------------------------------------------------
# Kernels
# ---------------------------------------------------------------------------
def _targetnet_kernel_s1(x_ref, p_ref, o_ref, *, layer_meta):
    """S == H*W == 1 path (real HyperIQA shape).

    x_ref : (Bt, C_in)          channels on the lane axis
    p_ref : (Bt, R_tot, C_max)  packed per-image weights + bias rows
    o_ref : (1, O_last, Bt)     lane-dense output (batch block on lanes)
    """
    h = x_ref[...].astype(jnp.float32)            # (Bt, C_in)
    p = p_ref[...].astype(jnp.float32)            # (Bt, R_tot, C_max), 1 load
    n = len(layer_meta)
    for i, (out_c, in_c, w_row, b_row) in enumerate(layer_meta):
        w = p[:, w_row:w_row + out_c, :in_c]      # (Bt, O, C)   static slices
        b = p[:, b_row, :out_c]                   # (Bt, O)      lane-dense bias
        # grouped 1x1 conv at S=1 == per-image matvec:
        # VPU broadcast-multiply + lane-axis reduce (XLU), MXU stays idle.
        y = jnp.sum(w * h[:, None, :], axis=-1) + b
        h = jax.nn.sigmoid(y) if i < n - 1 else y
    # lane-dense store: (O_last, Bt) slab, batch block on lanes
    o_ref[0] = h.T.astype(o_ref.dtype)


def _targetnet_kernel_sn(x_ref, p_ref, o_ref, *, layer_meta):
    """General spatial path (S > 1): per-image channel matmuls, spatial on lanes.

    x_ref : (Bt, C_in, St)
    p_ref : (Bt, R_tot, C_max)
    o_ref : (Bt, O_last, St)
    """
    h = x_ref[...].astype(jnp.float32)
    p = p_ref[...].astype(jnp.float32)
    n = len(layer_meta)
    for i, (out_c, in_c, w_row, b_row) in enumerate(layer_meta):
        w = p[:, w_row:w_row + out_c, :in_c]                  # (Bt, O, C)
        b = p[:, b_row, :out_c]                               # (Bt, O)
        y = jnp.einsum("boc,bcs->bos", w, h,
                       preferred_element_type=jnp.float32) + b[:, :, None]
        h = jax.nn.sigmoid(y) if i < n - 1 else y
    o_ref[...] = h.astype(o_ref.dtype)


# ---------------------------------------------------------------------------
# Wrapper
# ---------------------------------------------------------------------------
def _pack_params(ws, bs, c_max, r_tot, dtype):
    """Pack all layer weights + biases into one (B, R_tot, C_max) buffer."""
    pieces = []
    for w in ws:                                   # weight rows, channel-padded
        pieces.append(jnp.pad(w, ((0, 0), (0, 0), (0, c_max - w.shape[2]))))
    for b in bs:                                   # one lane-dense bias row/layer
        pieces.append(jnp.pad(b, ((0, 0), (0, c_max - b.shape[1])))[:, None, :])
    packed = jnp.concatenate(pieces, axis=1)
    assert packed.shape[1:] == (r_tot, c_max)
    return packed.astype(dtype)


def target_net_forward(x, paras, *, block_b=16, block_s=512,
                       transfer_dtype=jnp.float32):
    """x: (B, C, H, W) NCHW like PyTorch; paras: dict of target_fc{i}{w,b}."""
    B, C, H, W = x.shape
    S = H * W
    n_layers = 5

    # --- collect per-layer weights/biases + packing metadata -----------------
    ws, bs = [], []
    for i in range(1, n_layers + 1):
        w = paras[f"target_fc{i}w"]                # (B, out, in, 1, 1)
        b = paras[f"target_fc{i}b"]                # (B, out)
        ws.append(w.reshape(w.shape[0], w.shape[1], w.shape[2]))
        bs.append(b.reshape(b.shape[0], b.shape[1]))

    dims = [(int(w.shape[1]), int(w.shape[2])) for w in ws]     # (out, in)
    c_max = max(max(c for _, c in dims), max(o for o, _ in dims))
    w_rows, off = [], 0
    for o, _ in dims:
        w_rows.append(off)
        off += o
    r_weights = off
    r_tot = r_weights + n_layers                   # + one bias row per layer
    layer_meta = tuple((o, c, w_rows[i], r_weights + i)
                       for i, (o, c) in enumerate(dims))
    out_c = dims[-1][0]

    params = _pack_params(ws, bs, c_max, r_tot, transfer_dtype)

    # --- batch blocking (Bt images per grid step) ----------------------------
    # sub-32-bit transfer dtypes pack 2 rows/sublane -> keep Bt a multiple of 16
    min_bt = 8 if jnp.dtype(transfer_dtype).itemsize >= 4 else 16
    bt = _round_up(min(block_b, _round_up(B, min_bt)), min_bt)
    b_pad = _round_up(B, bt)
    nb = b_pad // bt
    if b_pad != B:
        params = jnp.pad(params, ((0, b_pad - B), (0, 0), (0, 0)))

    if S == 1:
        # ------- lane-dense path: channels on lanes, VPU mul + lane reduce ----
        x_r = x.reshape(B, C).astype(transfer_dtype)
        if b_pad != B:
            x_r = jnp.pad(x_r, ((0, b_pad - B), (0, 0)))
        kernel = functools.partial(_targetnet_kernel_s1, layer_meta=layer_meta)
        out = pl.pallas_call(
            kernel,
            out_shape=jax.ShapeDtypeStruct((nb, out_c, bt), jnp.float32),
            grid_spec=pltpu.PrefetchScalarGridSpec(
                num_scalar_prefetch=0,
                grid=(nb,),
                in_specs=[
                    pl.BlockSpec((bt, C), lambda i: (i, 0)),
                    pl.BlockSpec((bt, r_tot, c_max), lambda i: (i, 0, 0)),
                ],
                out_specs=pl.BlockSpec((1, out_c, bt), lambda i: (i, 0, 0)),
            ),
            compiler_params=pltpu.CompilerParams(
                dimension_semantics=("parallel",)),
        )(x_r, params)
        out = out.transpose(0, 2, 1).reshape(nb * bt, out_c)[:B]
        out = out.reshape(B, out_c, H, W)
    else:
        # ------- general spatial path: spatial on lanes, MXU per-image matmul -
        if S <= block_s:
            st, s_pad = S, S
        else:
            st = max(128, _round_up(block_s, 128))
            s_pad = _round_up(S, st)
        ns = s_pad // st
        x_r = x.reshape(B, C, S).astype(transfer_dtype)
        x_r = jnp.pad(x_r, ((0, b_pad - B), (0, 0), (0, s_pad - S)))
        kernel = functools.partial(_targetnet_kernel_sn, layer_meta=layer_meta)
        out = pl.pallas_call(
            kernel,
            out_shape=jax.ShapeDtypeStruct((b_pad, out_c, s_pad), jnp.float32),
            grid_spec=pltpu.PrefetchScalarGridSpec(
                num_scalar_prefetch=0,
                grid=(nb, ns),
                in_specs=[
                    pl.BlockSpec((bt, C, st), lambda i, j: (i, 0, j)),
                    # params index_map constant in the spatial axis -> resident
                    pl.BlockSpec((bt, r_tot, c_max), lambda i, j: (i, 0, 0)),
                ],
                out_specs=pl.BlockSpec((bt, out_c, st), lambda i, j: (i, 0, j)),
            ),
            compiler_params=pltpu.CompilerParams(
                dimension_semantics=("parallel", "parallel")),
        )(x_r, params)
        out = out[:B, :, :S].reshape(B, out_c, H, W)

    return jnp.squeeze(out)            # matches torch .squeeze(): drops size-1 dims


# ---------------------------------------------------------------------------
# Demo / correctness check
# ---------------------------------------------------------------------------
if __name__ == "__main__":
    key = jax.random.PRNGKey(0)

    # Small shapes consistent with the module (HyperIQA target vectors are 1x1).
    B = 16                                  # 2 batch blocks of 8 -> 2 parallel steps
    C_in, f1, f2, f3, f4, f5_out = 32, 16, 16, 16, 16, 1
    H = W = 1

    dims = [(f1, C_in), (f2, f1), (f3, f2), (f4, f3), (f5_out, f4)]
    keys = jax.random.split(key, 1 + 2 * len(dims))

    x = jax.random.normal(keys[0], (B, C_in, H, W), jnp.float32)
    paras = {}
    for i, (o, c) in enumerate(dims):
        paras[f"target_fc{i + 1}w"] = 0.2 * jax.random.normal(
            keys[1 + 2 * i], (B, o, c, 1, 1), jnp.float32)
        paras[f"target_fc{i + 1}b"] = 0.1 * jax.random.normal(
            keys[2 + 2 * i], (B, o), jnp.float32)

    # Exact (elementwise, f32) pure-JAX reference.
    def ref_forward(xx, pp):
        Bb, Cc, Hh, Ww = xx.shape
        h = xx.reshape(Bb, Cc, Hh * Ww).astype(jnp.float32)
        for i in range(1, 6):
            w = pp[f"target_fc{i}w"][..., 0, 0]                 # (B, O, C)
            b = pp[f"target_fc{i}b"]                            # (B, O)
            y = jnp.sum(w[:, :, :, None] * h[:, None, :, :], axis=2) + b[:, :, None]
            h = jax.nn.sigmoid(y) if i < 5 else y
        return jnp.squeeze(h.reshape(Bb, h.shape[1], Hh, Ww))

    # 1) S == 1 (the real HyperIQA shape): lane-dense batched kernel.
    q = jax.block_until_ready(target_net_forward(x, paras, block_b=8))
    ref = ref_forward(x, paras)
    assert q.shape == ref.shape, (q.shape, ref.shape)
    assert jnp.allclose(q, ref, atol=1e-5, rtol=1e-5), "S=1 mismatch vs reference"

    # 2) General spatial path (S > 1) keeps full module semantics.
    #    Loose tolerance: the in-kernel MXU matmul may use bf16 passes for f32.
    H2 = W2 = 4
    x2 = jax.random.normal(keys[0], (B, C_in, H2, W2), jnp.float32)
    q2 = jax.block_until_ready(target_net_forward(x2, paras, block_b=8))
    ref2 = ref_forward(x2, paras)
    assert q2.shape == ref2.shape, (q2.shape, ref2.shape)
    assert jnp.allclose(q2, ref2, atol=2e-2, rtol=2e-2), "S>1 mismatch vs reference"

    # 3) bf16 transfer dtype (v6e/v7x DMA-byte halving); in-kernel math stays f32,
    #    so it matches the exact reference evaluated on bf16-rounded inputs.
    xb = x.astype(jnp.bfloat16).astype(jnp.float32)
    parasb = {k: v.astype(jnp.bfloat16).astype(jnp.float32) for k, v in paras.items()}
    qb = jax.block_until_ready(
        target_net_forward(x, paras, block_b=8, transfer_dtype=jnp.bfloat16))
    refb = ref_forward(xb, parasb)
    assert qb.shape == refb.shape, (qb.shape, refb.shape)
    assert jnp.allclose(qb, refb, atol=1e-4, rtol=1e-4), "bf16-transfer mismatch"

    print("KERNEL_OK")
</pallas_src>

<mosaic_0001>
module attributes {stable_mosaic.version = 11 : i64} {
  func.func @_targetnet_kernel_s1(%arg0: i32, %arg1: memref<8x32xf32, #tpu.memory_space<vmem>>, %arg2: memref<8x70x32xf32, #tpu.memory_space<vmem>>, %arg3: memref<1x1x8xf32, #tpu.memory_space<vmem>>) attributes {dimension_semantics = [#tpu.dimension_semantics<parallel>], iteration_bounds = array<i64: 2>, scalar_prefetch = 0 : i64, scratch_operands = 0 : i64, tpu.core_type = #tpu.core_type<tc>, window_params = [{transform_indices = @transform_0, window_bounds = array<i64: 8, 32>}, {transform_indices = @transform_1, window_bounds = array<i64: 8, 70, 32>}, {transform_indices = @transform_2, window_bounds = array<i64: 1, 1, 8>}]} {
    %c0 = arith.constant 0 : index
    %c0_0 = arith.constant 0 : index
    %0 = vector.load %arg1[%c0, %c0_0] : memref<8x32xf32, #tpu.memory_space<vmem>>, vector<8x32xf32>
    %c0_1 = arith.constant 0 : index
    %c0_2 = arith.constant 0 : index
    %c0_3 = arith.constant 0 : index
    %1 = vector.load %arg2[%c0_1, %c0_2, %c0_3] : memref<8x70x32xf32, #tpu.memory_space<vmem>>, vector<8x70x32xf32>
    %2 = vector.extract_strided_slice %1 {offsets = [0, 0, 0], sizes = [8, 16, 32], strides = [1, 1, 1]} : vector<8x70x32xf32> to vector<8x16x32xf32>
    %3 = vector.extract_strided_slice %1 {offsets = [0, 65, 0], sizes = [8, 1, 16], strides = [1, 1, 1]} : vector<8x70x32xf32> to vector<8x1x16xf32>
    %4 = vector.shape_cast %3 : vector<8x1x16xf32> to vector<8x16xf32>
    %5 = vector.shape_cast %0 : vector<8x32xf32> to vector<8x1x32xf32>
    %6 = vector.broadcast %5 : vector<8x1x32xf32> to vector<8x16x32xf32>
    %7 = arith.mulf %2, %6 : vector<8x16x32xf32>
    %cst = arith.constant dense<0.000000e+00> : vector<8x16xf32>
    %8 = vector.multi_reduction <add>, %7, %cst [2] : vector<8x16x32xf32> to vector<8x16xf32>
    %9 = arith.addf %8, %4 : vector<8x16xf32>
    %10 = arith.negf %9 : vector<8x16xf32>
    %11 = math.exp %10 : vector<8x16xf32>
    %cst_4 = arith.constant 1.000000e+00 : f32
    %12 = vector.broadcast %cst_4 : f32 to vector<8x16xf32>
    %13 = arith.addf %12, %11 : vector<8x16xf32>
    %14 = arith.divf %12, %13 : vector<8x16xf32>
    %15 = vector.extract_strided_slice %1 {offsets = [0, 16, 0], sizes = [8, 16, 16], strides = [1, 1, 1]} : vector<8x70x32xf32> to vector<8x16x16xf32>
    %16 = vector.extract_strided_slice %1 {offsets = [0, 66, 0], sizes = [8, 1, 16], strides = [1, 1, 1]} : vector<8x70x32xf32> to vector<8x1x16xf32>
    %17 = vector.shape_cast %16 : vector<8x1x16xf32> to vector<8x16xf32>
    %18 = vector.shape_cast %14 : vector<8x16xf32> to vector<8x1x16xf32>
    %19 = vector.broadcast %18 : vector<8x1x16xf32> to vector<8x16x16xf32>
    %20 = arith.mulf %15, %19 : vector<8x16x16xf32>
    %cst_5 = arith.constant dense<0.000000e+00> : vector<8x16xf32>
    %21 = vector.multi_reduction <add>, %20, %cst_5 [2] : vector<8x16x16xf32> to vector<8x16xf32>
    %22 = arith.addf %21, %17 : vector<8x16xf32>
    %23 = arith.negf %22 : vector<8x16xf32>
    %24 = math.exp %23 : vector<8x16xf32>
    %cst_6 = arith.constant 1.000000e+00 : f32
    %25 = vector.broadcast %cst_6 : f32 to vector<8x16xf32>
    %26 = arith.addf %25, %24 : vector<8x16xf32>
    %27 = arith.divf %25, %26 : vector<8x16xf32>
    %28 = vector.extract_strided_slice %1 {offsets = [0, 32, 0], sizes = [8, 16, 16], strides = [1, 1, 1]} : vector<8x70x32xf32> to vector<8x16x16xf32>
    %29 = vector.extract_strided_slice %1 {offsets = [0, 67, 0], sizes = [8, 1, 16], strides = [1, 1, 1]} : vector<8x70x32xf32> to vector<8x1x16xf32>
    %30 = vector.shape_cast %29 : vector<8x1x16xf32> to vector<8x16xf32>
    %31 = vector.shape_cast %27 : vector<8x16xf32> to vector<8x1x16xf32>
    %32 = vector.broadcast %31 : vector<8x1x16xf32> to vector<8x16x16xf32>
    %33 = arith.mulf %28, %32 : vector<8x16x16xf32>
    %cst_7 = arith.constant dense<0.000000e+00> : vector<8x16xf32>
    %34 = vector.multi_reduction <add>, %33, %cst_7 [2] : vector<8x16x16xf32> to vector<8x16xf32>
    %35 = arith.addf %34, %30 : vector<8x16xf32>
    %36 = arith.negf %35 : vector<8x16xf32>
    %37 = math.exp %36 : vector<8x16xf32>
    %cst_8 = arith.constant 1.000000e+00 : f32
    %38 = vector.broadcast %cst_8 : f32 to vector<8x16xf32>
    %39 = arith.addf %38, %37 : vector<8x16xf32>
    %40 = arith.divf %38, %39 : vector<8x16xf32>
    %41 = vector.extract_strided_slice %1 {offsets = [0, 48, 0], sizes = [8, 16, 16], strides = [1, 1, 1]} : vector<8x70x32xf32> to vector<8x16x16xf32>
    %42 = vector.extract_strided_slice %1 {offsets = [0, 68, 0], sizes = [8, 1, 16], strides = [1, 1, 1]} : vector<8x70x32xf32> to vector<8x1x16xf32>
    %43 = vector.shape_cast %42 : vector<8x1x16xf32> to vector<8x16xf32>
    %44 = vector.shape_cast %40 : vector<8x16xf32> to vector<8x1x16xf32>
    %45 = vector.broadcast %44 : vector<8x1x16xf32> to vector<8x16x16xf32>
    %46 = arith.mulf %41, %45 : vector<8x16x16xf32>
    %cst_9 = arith.constant dense<0.000000e+00> : vector<8x16xf32>
    %47 = vector.multi_reduction <add>, %46, %cst_9 [2] : vector<8x16x16xf32> to vector<8x16xf32>
    %48 = arith.addf %47, %43 : vector<8x16xf32>
    %49 = arith.negf %48 : vector<8x16xf32>
    %50 = math.exp %49 : vector<8x16xf32>
    %cst_10 = arith.constant 1.000000e+00 : f32
    %51 = vector.broadcast %cst_10 : f32 to vector<8x16xf32>
    %52 = arith.addf %51, %50 : vector<8x16xf32>
    %53 = arith.divf %51, %52 : vector<8x16xf32>
    %54 = vector.extract_strided_slice %1 {offsets = [0, 64, 0], sizes = [8, 1, 16], strides = [1, 1, 1]} : vector<8x70x32xf32> to vector<8x1x16xf32>
    %55 = vector.extract_strided_slice %1 {offsets = [0, 69, 0], sizes = [8, 1, 1], strides = [1, 1, 1]} : vector<8x70x32xf32> to vector<8x1x1xf32>
    %56 = vector.shape_cast %55 : vector<8x1x1xf32> to vector<8x1xf32>
    %57 = vector.shape_cast %53 : vector<8x16xf32> to vector<8x1x16xf32>
    %58 = arith.mulf %54, %57 : vector<8x1x16xf32>
    %cst_11 = arith.constant dense<0.000000e+00> : vector<8x1xf32>
    %59 = vector.multi_reduction <add>, %58, %cst_11 [2] : vector<8x1x16xf32> to vector<8x1xf32>
    %60 = arith.addf %59, %56 : vector<8x1xf32>
    %61 = tpu.transpose %60, [1, 0] : vector<8x1xf32> -> vector<1x8xf32>
    %c0_12 = arith.constant 0 : index
    %c0_13 = arith.constant 0 : index
    %c0_14 = arith.constant 0 : index
    %62 = vector.load %arg3[%c0_12, %c0_13, %c0_14] : memref<1x1x8xf32, #tpu.memory_space<vmem>>, vector<1x1x8xf32>
    %63 = vector.shape_cast %62 : vector<1x1x8xf32> to vector<1x8xf32>
    %64 = vector.shape_cast %61 : vector<1x8xf32> to vector<1x1x8xf32>
    tpu.vector_store %arg3[%c0_12, %c0_13, %c0_14], %64 {strides = array<i32>} : memref<1x1x8xf32, #tpu.memory_space<vmem>>, vector<1x1x8xf32>,
    return
  }
  func.func @transform_0(%arg0: i32) -> (i32, i32) {
    %c0_i32 = arith.constant 0 : i32
    %c0_i32_0 = arith.constant 0 : i32
    return %arg0, %c0_i32 : i32, i32
  }
  func.func @transform_1(%arg0: i32) -> (i32, i32, i32) {
    %c0_i32 = arith.constant 0 : i32
    %c0_i32_0 = arith.constant 0 : i32
    %c0_i32_1 = arith.constant 0 : i32
    return %arg0, %c0_i32, %c0_i32_0 : i32, i32, i32
  }
  func.func @transform_2(%arg0: i32) -> (i32, i32, i32) {
    %c0_i32 = arith.constant 0 : i32
    %c0_i32_0 = arith.constant 0 : i32
    %c0_i32_1 = arith.constant 0 : i32
    return %arg0, %c0_i32, %c0_i32_0 : i32, i32, i32
  }
}

</mosaic_0001>

<llo_original>
// kernel: tpu_custom_call.1
$region0: #{tpu_custom_call.1}
  #allocation0 [shape = 'u32[]', space=smem, size = 0x4, offset = 0x4, fixed_abs, tag = 'smem constant byte address 0x4 - core index']
  #allocation1 [shape = 'u32[144,128]{1,0:T(1,128)}', space=vmem, size = 0x12000, scoped, tag = 'internal scratch']
  %s0 = inlined_call_operand.vmem [shape: f32[16,32], index: 0, kind: input, shape index: {}]
  %s1 = inlined_call_operand.vmem [shape: f32[16,70,32], index: 1, kind: input, shape index: {}]
  %s2 = inlined_call_operand.hbm [shape: f32[2,1,8], index: 2, kind: output, shape index: {}]
  %s3 = sld [smem:[#allocation0]]
  $region41: #{tpu_custom_call.1} parent=0
    _
  %s5 = ssub.s32 1, %s3
  %s6 = scalar_select 0, %s5, %s3
  $region1: #{tpu_custom_call.1} parent=0
    #allocation2 [shape = 'u8[1024]{0}', space=vmem, size = 0x400, scoped, tag = 'output window, operand 0']
    #allocation3 [shape = 's32[2]{0}', space=sflag, size = 0x8, scoped, tag = 'scoped memory for tpu_custom_call.1']
    %7 = vsyncpa [#allocation3], 0
    %s8 = scalar_lea.sflag [#allocation3], 1
    %9 = vsyncpa %s8, 0
    loop: start=0, step=1, limit=4
    $region2: #{tpu_custom_call.1} parent=1 // loop_pre_header
      _
    $region3: #{tpu_custom_call.1} parent=1 // loop_header
      %s11 = sphi 0, %s15
      %p12 = scmp.ge.s32.totalorder %s11, 4
      %s21 = sphi 0, %s23
      %s24 = sphi 0, %s21
      %s25 = sphi 0, %s24
      %s41 = sphi 0, %s25
      %s47 = sphi 0, %s49
      %s50 = sphi 0, %s47
      %s51 = sphi 0, %s50
      %s67 = sphi 0, %s51
      %s73 = sphi 0, %s75
      %s76 = sphi 0, %s73
      %s77 = sphi 0, %s76
      %s93 = sphi 0, %s77
    $region4: #{tpu_custom_call.1} parent=1 // loop_header_branch
      %14 = sbr.rel (%p12) target = $region8
    $region5: #{tpu_custom_call.1} parent=1 // loop_body
      %s16 = ssub.s32 %s11, 1
      %s17 = ssub.s32 %s11, 2
      %s18 = sadd.s32 %s11, 1
      %s19 = ssub.s32 %s11, %s18
      %p20 = scmp.eq.s32.totalorder %s19, 0
      %s22 = sadd.s32 %s21, 1
      %s23 = scalar_select %p20, %s21, %s22
      %p26 = pneg %p20
      %p27 = scmp.eq.s32.totalorder %s11, 1
      %p28 = por %p26, %p27
      %p29 = scmp.ne.s32.totalorder %s21, %s24
      %p30 = scmp.eq.s32.totalorder %s11, 0
      %p31 = por %p29, %p30
      %p32 = scmp.ne.s32.totalorder %s21, %s24
      %p33 = scmp.eq.s32.totalorder %s16, 1
      %p34 = por %p32, %p33
      %p35 = scmp.ne.s32.totalorder %s24, %s25
      %p36 = scmp.eq.s32.totalorder %s16, 0
      %p37 = por %p35, %p36
      %p38 = scmp.ne.s32.totalorder %s24, %s25
      %p39 = scmp.eq.s32.totalorder %s17, 1
      %p40 = por %p38, %p39
      %p42 = scmp.ne.s32.totalorder %s25, %s41
      %p43 = scmp.eq.s32.totalorder %s17, 0
      %p44 = por %p42, %p43
      %s45 = ssub.s32 %s11, %s18
      %p46 = scmp.eq.s32.totalorder %s45, 0
      %s48 = sadd.s32 %s47, 1
      %s49 = scalar_select %p46, %s47, %s48
      %p52 = pneg %p46
      %p53 = scmp.eq.s32.totalorder %s11, 1
      %p54 = por %p52, %p53
      %p55 = scmp.ne.s32.totalorder %s47, %s50
      %p56 = scmp.eq.s32.totalorder %s11, 0
      %p57 = por %p55, %p56
      %p58 = scmp.ne.s32.totalorder %s47, %s50
      %p59 = scmp.eq.s32.totalorder %s16, 1
      %p60 = por %p58, %p59
      %p61 = scmp.ne.s32.totalorder %s50, %s51
      %p62 = scmp.eq.s32.totalorder %s16, 0
      %p63 = por %p61, %p62
      %p64 = scmp.ne.s32.totalorder %s50, %s51
      %p65 = scmp.eq.s32.totalorder %s17, 1
      %p66 = por %p64, %p65
      %p68 = scmp.ne.s32.totalorder %s51, %s67
      %p69 = scmp.eq.s32.totalorder %s17, 0
      %p70 = por %p68, %p69
      %s71 = ssub.s32 %s11, %s18
      %p72 = scmp.eq.s32.totalorder %s71, 0
      %s74 = sadd.s32 %s73, 1
      %s75 = scalar_select %p72, %s73, %s74
      %p78 = pneg %p72
      %p79 = scmp.eq.s32.totalorder %s11, 1
      %p80 = por %p78, %p79
      %p81 = scmp.ne.s32.totalorder %s73, %s76
      %p82 = scmp.eq.s32.totalorder %s11, 0
      %p83 = por %p81, %p82
      %p84 = scmp.ne.s32.totalorder %s73, %s76
      %p85 = scmp.eq.s32.totalorder %s16, 1
      %p86 = por %p84, %p85
      %p87 = scmp.ne.s32.totalorder %s76, %s77
      %p88 = scmp.eq.s32.totalorder %s16, 0
      %p89 = por %p87, %p88
      %p90 = scmp.ne.s32.totalorder %s76, %s77
      %p91 = scmp.eq.s32.totalorder %s17, 1
      %p92 = por %p90, %p91
      %p94 = scmp.ne.s32.totalorder %s77, %s93
      %p95 = scmp.eq.s32.totalorder %s17, 0
      %p96 = por %p94, %p95
      %p97 = scmp.le.s32.totalorder 1, %s11
      %p98 = scmp.lt.s32.totalorder %s11, 3
      %p99 = pnand %p97, %p98
      %p100 = pneg %p99
      // Predicated region
      $region9: #{tpu_custom_call.1} parent=5 // pred_check
        _
      $region10: #{tpu_custom_call.1} parent=5 // pred_check_branch
        %102 = sbr.rel (%p99) target = $region12
      $region11: #{tpu_custom_call.1} parent=5 // pred_region
        %s103 = ssub.s32 %s11, 1
      $region12: #{tpu_custom_call.1} parent=5 // pred_fallthru
        _
      %p104 = scmp.lt.s32.totalorder %s11, 2
      // Predicated region
      $region13: #{tpu_custom_call.1} parent=5 // pred_check
        %p105 = pneg %p104
      $region14: #{tpu_custom_call.1} parent=5 // pred_check_branch
        %107 = sbr.rel (%p105) target = $region16
      $region15: #{tpu_custom_call.1} parent=5 // pred_region
        // Predicated region
        $region17: #{tpu_custom_call.1} parent=15 // pred_check
          %p108 = pneg %p31
        $region18: #{tpu_custom_call.1} parent=15 // pred_check_branch
          %110 = sbr.rel (%p108) target = $region20
        $region19: #{tpu_custom_call.1} parent=15 // pred_region
          %p111 = scmp.lt.s32.totalorder %s11, 1
          %s112 = scalar_select %p111, %s11, 1
          %s113 = smul.addr %s112, 8
          %s114 = scalar_lea.vmem %s0, %s113
        $region20: #{tpu_custom_call.1} parent=15 // pred_fallthru
          _
        // Predicated region
        $region21: #{tpu_custom_call.1} parent=15 // pred_check
          %p115 = pneg %p57
        $region22: #{tpu_custom_call.1} parent=15 // pred_check_branch
          %117 = sbr.rel (%p115) target = $region24
        $region23: #{tpu_custom_call.1} parent=15 // pred_region
          %s118 = smul.u32 8, %s11
          %p119 = scmp.lt.s32.totalorder %s118, 15
          %s120 = scalar_select %p119, %s118, 15
          %s121 = smul.addr %s120, 9
          %s122 = smul.addr %s121, 8
          %s123 = scalar_lea.vmem %s1, %s122
          %s124 = smul.u32 8, %s11
        $region24: #{tpu_custom_call.1} parent=15 // pred_fallthru
          _
      $region16: #{tpu_custom_call.1} parent=5 // pred_fallthru
        _
      %p125 = scmp.le.s32.totalorder 1, %s11
      %p126 = scmp.lt.s32.totalorder %s11, 3
      %p127 = pnand %p125, %p126
      %p128 = pneg %p127
      // Predicated region
      $region25: #{tpu_custom_call.1} parent=5 // pred_check
        _
      $region26: #{tpu_custom_call.1} parent=5 // pred_check_branch
        %130 = sbr.rel (%p127) target = $region28
      $region27: #{tpu_custom_call.1} parent=5 // pred_region
        %s131 = ssub.s32 %s11, 1
        %p132 = scmp.lt.s32.totalorder %s16, 1
        %s133 = scalar_select %p132, %s16, 1
        %s134 = smul.addr %s133, 8
        %s135 = scalar_lea.vmem %s0, %s134
        %p136 = pneg %p37
        %p137 = pneg %p34
        %s138 = smul.u32 8, %s16
        %p139 = scmp.lt.s32.totalorder %s138, 15
        %s140 = scalar_select %p139, %s138, 15
        %s141 = smul.addr %s140, 9
        %s142 = smul.addr %s141, 8
        %s143 = scalar_lea.vmem %s1, %s142
        %p144 = pneg %p63
        %p145 = pneg %p60
        %p146 = pneg %p89
        %p147 = pneg %p86
        %s148 = sand.u32 %s76, 1
        %s149 = scalar_lea.sflag [#allocation3], %s148
        %s150 = sand.u32 %s76, 1
        %s151 = scalar_lea.vmem [#allocation2], %s150
        %p152 = scmp.lt.s32.totalorder %s16, 1
        %s153 = scalar_select %p152, %s16, 1
        %s154 = smul.addr %s153, 8
        %s155 = scalar_lea.vmem %s0, %s154
        %s156 = smul.u32 8, %s16
        %p157 = scmp.lt.s32.totalorder %s156, 15
        %s158 = scalar_select %p157, %s156, 15
        %s159 = smul.addr %s158, 9
        %s160 = smul.addr %s159, 8
        %s161 = scalar_lea.vmem %s1, %s160
        %s162 = smul.u32 8, %s16
        %v163 = vld [vmem:[%s155] sm:$0xff]
        %v164 = vld [vmem:[%s161] sm:$0xff]
        %v165 = vld [vmem:[%s161 + $0x8] sm:$0xff]
        %v166 = vld [vmem:[%s161 + $0x10] sm:$0xff]
        %v167 = vld [vmem:[%s161 + $0x18] sm:$0xff]
        %v168 = vld [vmem:[%s161 + $0x20] sm:$0xff]
        %v169 = vld [vmem:[%s161 + $0x28] sm:$0xff]
        %v170 = vld [vmem:[%s161 + $0x30] sm:$0xff]
        %v171 = vld [vmem:[%s161 + $0x38] sm:$0xff]
        %v172 = vld [vmem:[%s161 + $0x40] sm:$0x3f]
        %v173 = vld [vmem:[%s161 + $0x48] sm:$0xff]
        %v174 = vld [vmem:[%s161 + $0x50] sm:$0xff]
        %v175 = vld [vmem:[%s161 + $0x58] sm:$0xff]
        %v176 = vld [vmem:[%s161 + $0x60] sm:$0xff]
        %v177 = vld [vmem:[%s161 + $0x68] sm:$0xff]
        %v178 = vld [vmem:[%s161 + $0x70] sm:$0xff]
        %v179 = vld [vmem:[%s161 + $0x78] sm:$0xff]
        %v180 = vld [vmem:[%s161 + $0x80] sm:$0xff]
        %v181 = vld [vmem:[%s161 + $0x88] sm:$0x3f]
        %v182 = vld [vmem:[%s161 + $0x90] sm:$0xff]
        %v183 = vld [vmem:[%s161 + $0x98] sm:$0xff]
        %v184 = vld [vmem:[%s161 + $0xa0] sm:$0xff]
        %v185 = vld [vmem:[%s161 + $0xa8] sm:$0xff]
        %v186 = vld [vmem:[%s161 + $0xb0] sm:$0xff]
        %v187 = vld [vmem:[%s161 + $0xb8] sm:$0xff]
        %v188 = vld [vmem:[%s161 + $0xc0] sm:$0xff]
        %v189 = vld [vmem:[%s161 + $0xc8] sm:$0xff]
        %v190 = vld [vmem:[%s161 + $0xd0] sm:$0x3f]
        %v191 = vld [vmem:[%s161 + $0xd8] sm:$0xff]
        %v192 = vld [vmem:[%s161 + $0xe0] sm:$0xff]
        %v193 = vld [vmem:[%s161 + $0xe8] sm:$0xff]
        %v194 = vld [vmem:[%s161 + $0xf0] sm:$0xff]
        %v195 = vld [vmem:[%s161 + $0xf8] sm:$0xff]
        %v196 = vld [vmem:[%s161 + $0x100] sm:$0xff]
        %v197 = vld [vmem:[%s161 + $0x108] sm:$0xff]
        %v198 = vld [vmem:[%s161 + $0x110] sm:$0xff]
        %v199 = vld [vmem:[%s161 + $0x118] sm:$0x3f]
        %v200 = vld [vmem:[%s161 + $0x120] sm:$0xff]
        %v201 = vld [vmem:[%s161 + $0x128] sm:$0xff]
        %v202 = vld [vmem:[%s161 + $0x130] sm:$0xff]
        %v203 = vld [vmem:[%s161 + $0x138] sm:$0xff]
        %v204 = vld [vmem:[%s161 + $0x140] sm:$0xff]
        %v205 = vld [vmem:[%s161 + $0x148] sm:$0xff]
        %v206 = vld [vmem:[%s161 + $0x150] sm:$0xff]
        %v207 = vld [vmem:[%s161 + $0x158] sm:$0xff]
        %v208 = vld [vmem:[%s161 + $0x160] sm:$0x3f]
        %v209 = vld [vmem:[%s161 + $0x168] sm:$0xff]
        %v210 = vld [vmem:[%s161 + $0x170] sm:$0xff]
        %v211 = vld [vmem:[%s161 + $0x178] sm:$0xff]
        %v212 = vld [vmem:[%s161 + $0x180] sm:$0xff]
        %v213 = vld [vmem:[%s161 + $0x188] sm:$0xff]
        %v214 = vld [vmem:[%s161 + $0x190] sm:$0xff]
        %v215 = vld [vmem:[%s161 + $0x198] sm:$0xff]
        %v216 = vld [vmem:[%s161 + $0x1a0] sm:$0xff]
        %v217 = vld [vmem:[%s161 + $0x1a8] sm:$0x3f]
        %v218 = vld [vmem:[%s161 + $0x1b0] sm:$0xff]
        %v219 = vld [vmem:[%s161 + $0x1b8] sm:$0xff]
        %v220 = vld [vmem:[%s161 + $0x1c0] sm:$0xff]
        %v221 = vld [vmem:[%s161 + $0x1c8] sm:$0xff]
        %v222 = vld [vmem:[%s161 + $0x1d0] sm:$0xff]
        %v223 = vld [vmem:[%s161 + $0x1d8] sm:$0xff]
        %v224 = vld [vmem:[%s161 + $0x1e0] sm:$0xff]
        %v225 = vld [vmem:[%s161 + $0x1e8] sm:$0xff]
        %v226 = vld [vmem:[%s161 + $0x1f0] sm:$0x3f]
        %v227 = vld [vmem:[%s161 + $0x1f8] sm:$0xff]
        %v228 = vld [vmem:[%s161 + $0x200] sm:$0xff]
        %v229 = vld [vmem:[%s161 + $0x208] sm:$0xff]
        %v230 = vld [vmem:[%s161 + $0x210] sm:$0xff]
        %v231 = vld [vmem:[%s161 + $0x218] sm:$0xff]
        %v232 = vld [vmem:[%s161 + $0x220] sm:$0xff]
        %v233 = vld [vmem:[%s161 + $0x228] sm:$0xff]
        %v234 = vld [vmem:[%s161 + $0x230] sm:$0xff]
        %v235 = vld [vmem:[%s161 + $0x238] sm:$0x3f]
        %v237 = vcombine.high %v163, %v163
        %v239 = vunpack.c.l.s4 1966171168
        %v240 = vunpack.c.0.s8 %v239
        %v241 = vlaneseq
        %v242 = vshrl.u32 %v241, 7
        %v243 = vsub.s32 %v240, %v242
        %v244 = vrot.slane %v163, %v243
        %v246 = vunpack.c.l.s4 1966171168
        %v247 = vunpack.c.0.s8 %v246
        %v248 = vlaneseq
        %v249 = vshrl.u32 %v248, 7
        %v250 = vsub.s32 %v247, %v249
        %v251 = vrot.slane %v237, %v250
        %v252 = vcombine.high %v244, %v244
        %v253 = vcombine.high %v251, %v251
        %v255 = vunpack.c.l.s4 1966171168
        %v256 = vunpack.c.0.s8 %v255
        %v257 = vlaneseq
        %v258 = vshrl.u32 %v257, 7
        %v259 = vsub.s32 %v256, %v258
        %v260 = vrot.slane %v244, %v259
        %v262 = vunpack.c.l.s4 1966171168
        %v263 = vunpack.c.0.s8 %v262
        %v264 = vlaneseq
        %v265 = vshrl.u32 %v264, 7
        %v266 = vsub.s32 %v263, %v265
        %v267 = vrot.slane %v251, %v266
        %v269 = vunpack.c.l.s4 1966171168
        %v270 = vunpack.c.0.s8 %v269
        %v271 = vlaneseq
        %v272 = vshrl.u32 %v271, 7
        %v273 = vsub.s32 %v270, %v272
        %v274 = vrot.slane %v252, %v273
        %v276 = vunpack.c.l.s4 1966171168
        %v277 = vunpack.c.0.s8 %v276
        %v278 = vlaneseq
        %v279 = vshrl.u32 %v278, 7
        %v280 = vsub.s32 %v277, %v279
        %v281 = vrot.slane %v253, %v280
        %v282 = vcombine.high %v260, %v260
        %v283 = vcombine.high %v267, %v267
        %v284 = vcombine.high %v274, %v274
        %v285 = vcombine.high %v281, %v281
        %v286 = vlaneseq
        %v287 = vshrl.u32 %v286, 7
        %v288 = vsub.s32 0, %v287
        %v289 = vrot.slane %v260, %v288
        %v290 = vlaneseq
        %v291 = vshrl.u32 %v290, 7
        %v292 = vsub.s32 0, %v291
        %v293 = vrot.slane %v274, %v292
        %v294 = vlaneseq
        %v295 = vshrl.u32 %v294, 7
        %v296 = vsub.s32 0, %v295
        %v297 = vrot.slane %v282, %v296
        %v298 = vlaneseq
        %v299 = vshrl.u32 %v298, 7
        %v300 = vsub.s32 0, %v299
        %v301 = vrot.slane %v284, %v300
        %v302 = vlaneseq
        %v303 = vshrl.u32 %v302, 7
        %v304 = vsub.s32 0, %v303
        %v305 = vrot.slane %v267, %v304
        %v306 = vlaneseq
        %v307 = vshrl.u32 %v306, 7
        %v308 = vsub.s32 0, %v307
        %v309 = vrot.slane %v281, %v308
        %v310 = vlaneseq
        %v311 = vshrl.u32 %v310, 7
        %v312 = vsub.s32 0, %v311
        %v313 = vrot.slane %v283, %v312
        %v314 = vlaneseq
        %v315 = vshrl.u32 %v314, 7
        %v316 = vsub.s32 0, %v315
        %v317 = vrot.slane %v285, %v316
        %v326 = vmul.f32 %v164, %v289
        %v327 = vmul.f32 %v165, %v289
        %v328 = vmul.f32 %v173, %v293
        %v329 = vmul.f32 %v174, %v293
        %v330 = vmul.f32 %v182, %v297
        %v331 = vmul.f32 %v183, %v297
        %v332 = vmul.f32 %v191, %v301
        %v333 = vmul.f32 %v192, %v301
        %v334 = vmul.f32 %v200, %v305
        %v335 = vmul.f32 %v201, %v305
        %v336 = vmul.f32 %v209, %v309
        %v337 = vmul.f32 %v210, %v309
        %v338 = vmul.f32 %v218, %v313
        %v339 = vmul.f32 %v219, %v313
        %v340 = vmul.f32 %v227, %v317
        %v341 = vmul.f32 %v228, %v317
        %vm342 = vcmask 261120
        %v343 = vsel %vm342, %v326, 0.0
        %344 = vadd.xlane.f32.xlu0 %v343
        %v345 = vpop.xlane.xlu0 %344
        %v346 = vsel %vm342, %v327, 0.0
        %347 = vadd.xlane.f32.xlu0 %v346
        %v348 = vpop.xlane.xlu0 %347
        %v349 = vsel %vm342, %v328, 0.0
        %350 = vadd.xlane.f32.xlu0 %v349
        %v351 = vpop.xlane.xlu0 %350
        %v352 = vsel %vm342, %v329, 0.0
        %353 = vadd.xlane.f32.xlu0 %v352
        %v354 = vpop.xlane.xlu0 %353
        %v355 = vsel %vm342, %v330, 0.0
        %356 = vadd.xlane.f32.xlu0 %v355
        %v357 = vpop.xlane.xlu0 %356
        %v358 = vsel %vm342, %v331, 0.0
        %359 = vadd.xlane.f32.xlu0 %v358
        %v360 = vpop.xlane.xlu0 %359
        %v361 = vsel %vm342, %v332, 0.0
        %362 = vadd.xlane.f32.xlu0 %v361
        %v363 = vpop.xlane.xlu0 %362
        %v364 = vsel %vm342, %v333, 0.0
        %365 = vadd.xlane.f32.xlu0 %v364
        %v366 = vpop.xlane.xlu0 %365
        %v367 = vsel %vm342, %v334, 0.0
        %368 = vadd.xlane.f32.xlu0 %v367
        %v369 = vpop.xlane.xlu0 %368
        %v370 = vsel %vm342, %v335, 0.0
        %371 = vadd.xlane.f32.xlu0 %v370
        %v372 = vpop.xlane.xlu0 %371
        %v373 = vsel %vm342, %v336, 0.0
        %374 = vadd.xlane.f32.xlu0 %v373
        %v375 = vpop.xlane.xlu0 %374
        %v376 = vsel %vm342, %v337, 0.0
        %377 = vadd.xlane.f32.xlu0 %v376
        %v378 = vpop.xlane.xlu0 %377
        %v379 = vsel %vm342, %v338, 0.0
        %380 = vadd.xlane.f32.xlu0 %v379
        %v381 = vpop.xlane.xlu0 %380
        %v382 = vsel %vm342, %v339, 0.0
        %383 = vadd.xlane.f32.xlu0 %v382
        %v384 = vpop.xlane.xlu0 %383
        %v385 = vsel %vm342, %v340, 0.0
        %386 = vadd.xlane.f32.xlu0 %v385
        %v387 = vpop.xlane.xlu0 %386
        %v388 = vsel %vm342, %v341, 0.0
        %389 = vadd.xlane.f32.xlu0 %v388
        %v390 = vpop.xlane.xlu0 %389
        %v399 = vlaneseq
        %v400 = vshrl.u32 %v399, 7
        %v401 = vsub.s32 1, %v400
        %v402 = vrot.slane %v172, %v401
        %404 = vbcast.lane.b32.xlu0 %v402, 256
        %v405 = vpop.permute.xlu0 %404
        %s407 = sor.u32 256, 8
        %408 = vbcast.lane.b32.xlu0 %v402, %s407
        %v409 = vpop.permute.xlu0 %408
        %v410 = vlaneseq
        %v411 = vshrl.u32 %v410, 7
        %v412 = vsub.s32 1, %v411
        %v413 = vrot.slane %v181, %v412
        %415 = vbcast.lane.b32.xlu0 %v413, 256
        %v416 = vpop.permute.xlu0 %415
        %s418 = sor.u32 256, 8
        %419 = vbcast.lane.b32.xlu0 %v413, %s418
        %v420 = vpop.permute.xlu0 %419
        %v421 = vlaneseq
        %v422 = vshrl.u32 %v421, 7
        %v423 = vsub.s32 1, %v422
        %v424 = vrot.slane %v190, %v423
        %426 = vbcast.lane.b32.xlu0 %v424, 256
        %v427 = vpop.permute.xlu0 %426
        %s429 = sor.u32 256, 8
        %430 = vbcast.lane.b32.xlu0 %v424, %s429
        %v431 = vpop.permute.xlu0 %430
        %v432 = vlaneseq
        %v433 = vshrl.u32 %v432, 7
        %v434 = vsub.s32 1, %v433
        %v435 = vrot.slane %v199, %v434
        %437 = vbcast.lane.b32.xlu0 %v435, 256
        %v438 = vpop.permute.xlu0 %437
        %s440 = sor.u32 256, 8
        %441 = vbcast.lane.b32.xlu0 %v435, %s440
        %v442 = vpop.permute.xlu0 %441
        %v443 = vlaneseq
        %v444 = vshrl.u32 %v443, 7
        %v445 = vsub.s32 1, %v444
        %v446 = vrot.slane %v208, %v445
        %448 = vbcast.lane.b32.xlu0 %v446, 256
        %v449 = vpop.permute.xlu0 %448
        %s451 = sor.u32 256, 8
        %452 = vbcast.lane.b32.xlu0 %v446, %s451
        %v453 = vpop.permute.xlu0 %452
        %v454 = vlaneseq
        %v455 = vshrl.u32 %v454, 7
        %v456 = vsub.s32 1, %v455
        %v457 = vrot.slane %v217, %v456
        %459 = vbcast.lane.b32.xlu0 %v457, 256
        %v460 = vpop.permute.xlu0 %459
        %s462 = sor.u32 256, 8
        %463 = vbcast.lane.b32.xlu0 %v457, %s462
        %v464 = vpop.permute.xlu0 %463
        %v465 = vlaneseq
        %v466 = vshrl.u32 %v465, 7
        %v467 = vsub.s32 1, %v466
        %v468 = vrot.slane %v226, %v467
        %470 = vbcast.lane.b32.xlu0 %v468, 256
        %v471 = vpop.permute.xlu0 %470
        %s473 = sor.u32 256, 8
        %474 = vbcast.lane.b32.xlu0 %v468, %s473
        %v475 = vpop.permute.xlu0 %474
        %v476 = vlaneseq
        %v477 = vshrl.u32 %v476, 7
        %v478 = vsub.s32 1, %v477
        %v479 = vrot.slane %v235, %v478
        %481 = vbcast.lane.b32.xlu0 %v479, 256
        %v482 = vpop.permute.xlu0 %481
        %s484 = sor.u32 256, 8
        %485 = vbcast.lane.b32.xlu0 %v479, %s484
        %v486 = vpop.permute.xlu0 %485
        %v503 = vadd.f32 %v345, %v405
        %v504 = vadd.f32 %v348, %v409
        %v505 = vadd.f32 %v351, %v416
        %v506 = vadd.f32 %v354, %v420
        %v507 = vadd.f32 %v357, %v427
        %v508 = vadd.f32 %v360, %v431
        %v509 = vadd.f32 %v363, %v438
        %v510 = vadd.f32 %v366, %v442
        %v511 = vadd.f32 %v369, %v449
        %v512 = vadd.f32 %v372, %v453
        %v513 = vadd.f32 %v375, %v460
        %v514 = vadd.f32 %v378, %v464
        %v515 = vadd.f32 %v381, %v471
        %v516 = vadd.f32 %v384, %v475
        %v517 = vadd.f32 %v387, %v482
        %v518 = vadd.f32 %v390, %v486
        %v519 = vxor.u32 %v503, 2147483648
        %v520 = vxor.u32 %v504, 2147483648
        %v521 = vxor.u32 %v505, 2147483648
        %v522 = vxor.u32 %v506, 2147483648
        %v523 = vxor.u32 %v507, 2147483648
        %v524 = vxor.u32 %v508, 2147483648
        %v525 = vxor.u32 %v509, 2147483648
        %v526 = vxor.u32 %v510, 2147483648
        %v527 = vxor.u32 %v511, 2147483648
        %v528 = vxor.u32 %v512, 2147483648
        %v529 = vxor.u32 %v513, 2147483648
        %v530 = vxor.u32 %v514, 2147483648
        %v531 = vxor.u32 %v515, 2147483648
        %v532 = vxor.u32 %v516, 2147483648
        %v533 = vxor.u32 %v517, 2147483648
        %v534 = vxor.u32 %v518, 2147483648
        %v535 = vmul.f32 %v519, 1.442695
        %v536 = vpow.pop %v535
        %v537 = vmul.f32 %v520, 1.442695
        %v538 = vpow.pop %v537
        %v539 = vmul.f32 %v521, 1.442695
        %v540 = vpow.pop %v539
        %v541 = vmul.f32 %v522, 1.442695
        %v542 = vpow.pop %v541
        %v543 = vmul.f32 %v523, 1.442695
        %v544 = vpow.pop %v543
        %v545 = vmul.f32 %v524, 1.442695
        %v546 = vpow.pop %v545
        %v547 = vmul.f32 %v525, 1.442695
        %v548 = vpow.pop %v547
        %v549 = vmul.f32 %v526, 1.442695
        %v550 = vpow.pop %v549
        %v551 = vmul.f32 %v527, 1.442695
        %v552 = vpow.pop %v551
        %v553 = vmul.f32 %v528, 1.442695
        %v554 = vpow.pop %v553
        %v555 = vmul.f32 %v529, 1.442695
        %v556 = vpow.pop %v555
        %v557 = vmul.f32 %v530, 1.442695
        %v558 = vpow.pop %v557
        %v559 = vmul.f32 %v531, 1.442695
        %v560 = vpow.pop %v559
        %v561 = vmul.f32 %v532, 1.442695
        %v562 = vpow.pop %v561
        %v563 = vmul.f32 %v533, 1.442695
        %v564 = vpow.pop %v563
        %v565 = vmul.f32 %v534, 1.442695
        %v566 = vpow.pop %v565
        %v567 = vadd.f32 %v536, 1.0
        %v568 = vadd.f32 %v538, 1.0
        %v569 = vadd.f32 %v540, 1.0
        %v570 = vadd.f32 %v542, 1.0
        %v571 = vadd.f32 %v544, 1.0
        %v572 = vadd.f32 %v546, 1.0
        %v573 = vadd.f32 %v548, 1.0
        %v574 = vadd.f32 %v550, 1.0
        %v575 = vadd.f32 %v552, 1.0
        %v576 = vadd.f32 %v554, 1.0
        %v577 = vadd.f32 %v556, 1.0
        %v578 = vadd.f32 %v558, 1.0
        %v579 = vadd.f32 %v560, 1.0
        %v580 = vadd.f32 %v562, 1.0
        %v581 = vadd.f32 %v564, 1.0
        %v582 = vadd.f32 %v566, 1.0
        %v583 = vrcp.pop %v567
        %v584 = vmul.f32 1.0, %v583
        %v585 = vrcp.pop %v568
        %v586 = vmul.f32 1.0, %v585
        %v587 = vrcp.pop %v569
        %v588 = vmul.f32 1.0, %v587
        %v589 = vrcp.pop %v570
        %v590 = vmul.f32 1.0, %v589
        %v591 = vrcp.pop %v571
        %v592 = vmul.f32 1.0, %v591
        %v593 = vrcp.pop %v572
        %v594 = vmul.f32 1.0, %v593
        %v595 = vrcp.pop %v573
        %v596 = vmul.f32 1.0, %v595
        %v597 = vrcp.pop %v574
        %v598 = vmul.f32 1.0, %v597
        %v599 = vrcp.pop %v575
        %v600 = vmul.f32 1.0, %v599
        %v601 = vrcp.pop %v576
        %v602 = vmul.f32 1.0, %v601
        %v603 = vrcp.pop %v577
        %v604 = vmul.f32 1.0, %v603
        %v605 = vrcp.pop %v578
        %v606 = vmul.f32 1.0, %v605
        %v607 = vrcp.pop %v579
        %v608 = vmul.f32 1.0, %v607
        %v609 = vrcp.pop %v580
        %v610 = vmul.f32 1.0, %v609
        %v611 = vrcp.pop %v581
        %v612 = vmul.f32 1.0, %v611
        %v613 = vrcp.pop %v582
        %v614 = vmul.f32 1.0, %v613
        %631 = vset.pattern.permute.xlu0 0
        %632 = vperm.xlu0 %631, %v584
        %v633 = vpop.permute.xlu0 %632
        %634 = vset.pattern.permute.xlu0 0
        %635 = vperm.xlu0 %634, %v586
        %v636 = vpop.permute.xlu0 %635
        %637 = vset.pattern.permute.xlu0 0
        %638 = vperm.xlu0 %637, %v588
        %v639 = vpop.permute.xlu0 %638
        %640 = vset.pattern.permute.xlu0 0
        %641 = vperm.xlu0 %640, %v590
        %v642 = vpop.permute.xlu0 %641
        %643 = vset.pattern.permute.xlu0 0
        %644 = vperm.xlu0 %643, %v592
        %v645 = vpop.permute.xlu0 %644
        %646 = vset.pattern.permute.xlu0 0
        %647 = vperm.xlu0 %646, %v594
        %v648 = vpop.permute.xlu0 %647
        %649 = vset.pattern.permute.xlu0 0
        %650 = vperm.xlu0 %649, %v596
        %v651 = vpop.permute.xlu0 %650
        %652 = vset.pattern.permute.xlu0 0
        %653 = vperm.xlu0 %652, %v598
        %v654 = vpop.permute.xlu0 %653
        %655 = vset.pattern.permute.xlu0 0
        %656 = vperm.xlu0 %655, %v600
        %v657 = vpop.permute.xlu0 %656
        %658 = vset.pattern.permute.xlu0 0
        %659 = vperm.xlu0 %658, %v602
        %v660 = vpop.permute.xlu0 %659
        %661 = vset.pattern.permute.xlu0 0
        %662 = vperm.xlu0 %661, %v604
        %v663 = vpop.permute.xlu0 %662
        %664 = vset.pattern.permute.xlu0 0
        %665 = vperm.xlu0 %664, %v606
        %v666 = vpop.permute.xlu0 %665
        %667 = vset.pattern.permute.xlu0 0
        %668 = vperm.xlu0 %667, %v608
        %v669 = vpop.permute.xlu0 %668
        %670 = vset.pattern.permute.xlu0 0
        %671 = vperm.xlu0 %670, %v610
        %v672 = vpop.permute.xlu0 %671
        %673 = vset.pattern.permute.xlu0 0
        %674 = vperm.xlu0 %673, %v612
        %v675 = vpop.permute.xlu0 %674
        %676 = vset.pattern.permute.xlu0 0
        %677 = vperm.xlu0 %676, %v614
        %v678 = vpop.permute.xlu0 %677
        %v679 = vlaneseq
        %v680 = vand.u32 %v679, 127
        %v681 = vlaneseq
        %v682 = vshrl.u32 %v681, 7
        %v683 = vsub.s32 %v680, %v682
        %v684 = vrot.slane %v633, %v683
        %v685 = vadd.s32 %v680, 4294967288
        %v686 = vlaneseq
        %v687 = vshrl.u32 %v686, 7
        %v688 = vsub.s32 %v685, %v687
        %v689 = vrot.slane %v636, %v688
        %vm690 = vcmask 130112
        %v691 = vsel %vm690, %v689, %v684
        %v692 = vlaneseq
        %v693 = vshrl.u32 %v692, 7
        %v694 = vsub.s32 %v680, %v693
        %v695 = vrot.slane %v639, %v694
        %v696 = vlaneseq
        %v697 = vshrl.u32 %v696, 7
        %v698 = vsub.s32 %v685, %v697
        %v699 = vrot.slane %v642, %v698
        %v700 = vsel %vm690, %v699, %v695
        %v701 = vlaneseq
        %v702 = vshrl.u32 %v701, 7
        %v703 = vsub.s32 %v680, %v702
        %v704 = vrot.slane %v645, %v703
        %v705 = vlaneseq
        %v706 = vshrl.u32 %v705, 7
        %v707 = vsub.s32 %v685, %v706
        %v708 = vrot.slane %v648, %v707
        %v709 = vsel %vm690, %v708, %v704
        %v710 = vlaneseq
        %v711 = vshrl.u32 %v710, 7
        %v712 = vsub.s32 %v680, %v711
        %v713 = vrot.slane %v651, %v712
        %v714 = vlaneseq
        %v715 = vshrl.u32 %v714, 7
        %v716 = vsub.s32 %v685, %v715
        %v717 = vrot.slane %v654, %v716
        %v718 = vsel %vm690, %v717, %v713
        %v719 = vlaneseq
        %v720 = vshrl.u32 %v719, 7
        %v721 = vsub.s32 %v680, %v720
        %v722 = vrot.slane %v657, %v721
        %v723 = vlaneseq
        %v724 = vshrl.u32 %v723, 7
        %v725 = vsub.s32 %v685, %v724
        %v726 = vrot.slane %v660, %v725
        %v727 = vsel %vm690, %v726, %v722
        %v728 = vlaneseq
        %v729 = vshrl.u32 %v728, 7
        %v730 = vsub.s32 %v680, %v729
        %v731 = vrot.slane %v663, %v730
        %v732 = vlaneseq
        %v733 = vshrl.u32 %v732, 7
        %v734 = vsub.s32 %v685, %v733
        %v735 = vrot.slane %v666, %v734
        %v736 = vsel %vm690, %v735, %v731
        %v737 = vlaneseq
        %v738 = vshrl.u32 %v737, 7
        %v739 = vsub.s32 %v680, %v738
        %v740 = vrot.slane %v669, %v739
        %v741 = vlaneseq
        %v742 = vshrl.u32 %v741, 7
        %v743 = vsub.s32 %v685, %v742
        %v744 = vrot.slane %v672, %v743
        %v745 = vsel %vm690, %v744, %v740
        %v746 = vlaneseq
        %v747 = vshrl.u32 %v746, 7
        %v748 = vsub.s32 %v680, %v747
        %v749 = vrot.slane %v675, %v748
        %v750 = vlaneseq
        %v751 = vshrl.u32 %v750, 7
        %v752 = vsub.s32 %v685, %v751
        %v753 = vrot.slane %v678, %v752
        %v754 = vsel %vm690, %v753, %v749
        %vm755 = vcmask 1041409
        %vm756 = vcmask 1042434
        %v757 = vsel %vm756, %v691, %v691
        %vm758 = vcmask 1043459
        %v759 = vsel %vm758, %v691, %v757
        %vm760 = vcmask 1044484
        %v761 = vsel %vm760, %v691, %v759
        %vm762 = vcmask 1045509
        %v763 = vsel %vm762, %v691, %v761
        %vm764 = vcmask 1046534
        %v765 = vsel %vm764, %v691, %v763
        %vm766 = vcmask 1047559
        %v767 = vsel %vm766, %v691, %v765
        %v768 = vsel %vm756, %v700, %v700
        %v769 = vsel %vm758, %v700, %v768
        %v770 = vsel %vm760, %v700, %v769
        %v771 = vsel %vm762, %v700, %v770
        %v772 = vsel %vm764, %v700, %v771
        %v773 = vsel %vm766, %v700, %v772
        %v774 = vsel %vm756, %v709, %v709
        %v775 = vsel %vm758, %v709, %v774
        %v776 = vsel %vm760, %v709, %v775
        %v777 = vsel %vm762, %v709, %v776
        %v778 = vsel %vm764, %v709, %v777
        %v779 = vsel %vm766, %v709, %v778
        %v780 = vsel %vm756, %v718, %v718
        %v781 = vsel %vm758, %v718, %v780
        %v782 = vsel %vm760, %v718, %v781
        %v783 = vsel %vm762, %v718, %v782
        %v784 = vsel %vm764, %v718, %v783
        %v785 = vsel %vm766, %v718, %v784
        %v786 = vsel %vm756, %v727, %v727
        %v787 = vsel %vm758, %v727, %v786
        %v788 = vsel %vm760, %v727, %v787
        %v789 = vsel %vm762, %v727, %v788
        %v790 = vsel %vm764, %v727, %v789
        %v791 = vsel %vm766, %v727, %v790
        %v792 = vsel %vm756, %v736, %v736
        %v793 = vsel %vm758, %v736, %v792
        %v794 = vsel %vm760, %v736, %v793
        %v795 = vsel %vm762, %v736, %v794
        %v796 = vsel %vm764, %v736, %v795
        %v797 = vsel %vm766, %v736, %v796
        %v798 = vsel %vm756, %v745, %v745
        %v799 = vsel %vm758, %v745, %v798
        %v800 = vsel %vm760, %v745, %v799
        %v801 = vsel %vm762, %v745, %v800
        %v802 = vsel %vm764, %v745, %v801
        %v803 = vsel %vm766, %v745, %v802
        %v804 = vsel %vm756, %v754, %v754
        %v805 = vsel %vm758, %v754, %v804
        %v806 = vsel %vm760, %v754, %v805
        %v807 = vsel %vm762, %v754, %v806
        %v808 = vsel %vm764, %v754, %v807
        %v809 = vsel %vm766, %v754, %v808
        %v818 = vmul.f32 %v166, %v767
        %v819 = vmul.f32 %v167, %v767
        %v820 = vmul.f32 %v175, %v773
        %v821 = vmul.f32 %v176, %v773
        %v822 = vmul.f32 %v184, %v779
        %v823 = vmul.f32 %v185, %v779
        %v824 = vmul.f32 %v193, %v785
        %v825 = vmul.f32 %v194, %v785
        %v826 = vmul.f32 %v202, %v791
        %v827 = vmul.f32 %v203, %v791
        %v828 = vmul.f32 %v211, %v797
        %v829 = vmul.f32 %v212, %v797
        %v830 = vmul.f32 %v220, %v803
        %v831 = vmul.f32 %v221, %v803
        %v832 = vmul.f32 %v229, %v809
        %v833 = vmul.f32 %v230, %v809
        %vm834 = vcmask 130048
        %v835 = vsel %vm834, %v818, 0.0
        %836 = vadd.xlane.f32.xlu0 %v835
        %v837 = vpop.xlane.xlu0 %836
        %v838 = vsel %vm834, %v819, 0.0
        %839 = vadd.xlane.f32.xlu0 %v838
        %v840 = vpop.xlane.xlu0 %839
        %v841 = vsel %vm834, %v820, 0.0
        %842 = vadd.xlane.f32.xlu0 %v841
        %v843 = vpop.xlane.xlu0 %842
        %v844 = vsel %vm834, %v821, 0.0
        %845 = vadd.xlane.f32.xlu0 %v844
        %v846 = vpop.xlane.xlu0 %845
        %v847 = vsel %vm834, %v822, 0.0
        %848 = vadd.xlane.f32.xlu0 %v847
        %v849 = vpop.xlane.xlu0 %848
        %v850 = vsel %vm834, %v823, 0.0
        %851 = vadd.xlane.f32.xlu0 %v850
        %v852 = vpop.xlane.xlu0 %851
        %v853 = vsel %vm834, %v824, 0.0
        %854 = vadd.xlane.f32.xlu0 %v853
        %v855 = vpop.xlane.xlu0 %854
        %v856 = vsel %vm834, %v825, 0.0
        %857 = vadd.xlane.f32.xlu0 %v856
        %v858 = vpop.xlane.xlu0 %857
        %v859 = vsel %vm834, %v826, 0.0
        %860 = vadd.xlane.f32.xlu0 %v859
        %v861 = vpop.xlane.xlu0 %860
        %v862 = vsel %vm834, %v827, 0.0
        %863 = vadd.xlane.f32.xlu0 %v862
        %v864 = vpop.xlane.xlu0 %863
        %v865 = vsel %vm834, %v828, 0.0
        %866 = vadd.xlane.f32.xlu0 %v865
        %v867 = vpop.xlane.xlu0 %866
        %v868 = vsel %vm834, %v829, 0.0
        %869 = vadd.xlane.f32.xlu0 %v868
        %v870 = vpop.xlane.xlu0 %869
        %v871 = vsel %vm834, %v830, 0.0
        %872 = vadd.xlane.f32.xlu0 %v871
        %v873 = vpop.xlane.xlu0 %872
        %v874 = vsel %vm834, %v831, 0.0
        %875 = vadd.xlane.f32.xlu0 %v874
        %v876 = vpop.xlane.xlu0 %875
        %v877 = vsel %vm834, %v832, 0.0
        %878 = vadd.xlane.f32.xlu0 %v877
        %v879 = vpop.xlane.xlu0 %878
        %v880 = vsel %vm834, %v833, 0.0
        %881 = vadd.xlane.f32.xlu0 %v880
        %v882 = vpop.xlane.xlu0 %881
        %v883 = vlaneseq
        %v884 = vshrl.u32 %v883, 7
        %v885 = vsub.s32 2, %v884
        %v886 = vrot.slane %v172, %v885
        %888 = vbcast.lane.b32.xlu0 %v886, 256
        %v889 = vpop.permute.xlu0 %888
        %s891 = sor.u32 256, 8
        %892 = vbcast.lane.b32.xlu0 %v886, %s891
        %v893 = vpop.permute.xlu0 %892
        %v894 = vlaneseq
        %v895 = vshrl.u32 %v894, 7
        %v896 = vsub.s32 2, %v895
        %v897 = vrot.slane %v181, %v896
        %899 = vbcast.lane.b32.xlu0 %v897, 256
        %v900 = vpop.permute.xlu0 %899
        %s902 = sor.u32 256, 8
        %903 = vbcast.lane.b32.xlu0 %v897, %s902
        %v904 = vpop.permute.xlu0 %903
        %v905 = vlaneseq
        %v906 = vshrl.u32 %v905, 7
        %v907 = vsub.s32 2, %v906
        %v908 = vrot.slane %v190, %v907
        %910 = vbcast.lane.b32.xlu0 %v908, 256
        %v911 = vpop.permute.xlu0 %910
        %s913 = sor.u32 256, 8
        %914 = vbcast.lane.b32.xlu0 %v908, %s913
        %v915 = vpop.permute.xlu0 %914
        %v916 = vlaneseq
        %v917 = vshrl.u32 %v916, 7
        %v918 = vsub.s32 2, %v917
        %v919 = vrot.slane %v199, %v918
        %921 = vbcast.lane.b32.xlu0 %v919, 256
        %v922 = vpop.permute.xlu0 %921
        %s924 = sor.u32 256, 8
        %925 = vbcast.lane.b32.xlu0 %v919, %s924
        %v926 = vpop.permute.xlu0 %925
        %v927 = vlaneseq
        %v928 = vshrl.u32 %v927, 7
        %v929 = vsub.s32 2, %v928
        %v930 = vrot.slane %v208, %v929
        %932 = vbcast.lane.b32.xlu0 %v930, 256
        %v933 = vpop.permute.xlu0 %932
        %s935 = sor.u32 256, 8
        %936 = vbcast.lane.b32.xlu0 %v930, %s935
        %v937 = vpop.permute.xlu0 %936
        %v938 = vlaneseq
        %v939 = vshrl.u32 %v938, 7
        %v940 = vsub.s32 2, %v939
        %v941 = vrot.slane %v217, %v940
        %943 = vbcast.lane.b32.xlu0 %v941, 256
        %v944 = vpop.permute.xlu0 %943
        %s946 = sor.u32 256, 8
        %947 = vbcast.lane.b32.xlu0 %v941, %s946
        %v948 = vpop.permute.xlu0 %947
        %v949 = vlaneseq
        %v950 = vshrl.u32 %v949, 7
        %v951 = vsub.s32 2, %v950
        %v952 = vrot.slane %v226, %v951
        %954 = vbcast.lane.b32.xlu0 %v952, 256
        %v955 = vpop.permute.xlu0 %954
        %s957 = sor.u32 256, 8
        %958 = vbcast.lane.b32.xlu0 %v952, %s957
        %v959 = vpop.permute.xlu0 %958
        %v960 = vlaneseq
        %v961 = vshrl.u32 %v960, 7
        %v962 = vsub.s32 2, %v961
        %v963 = vrot.slane %v235, %v962
        %965 = vbcast.lane.b32.xlu0 %v963, 256
        %v966 = vpop.permute.xlu0 %965
        %s968 = sor.u32 256, 8
        %969 = vbcast.lane.b32.xlu0 %v963, %s968
        %v970 = vpop.permute.xlu0 %969
        %v987 = vadd.f32 %v837, %v889
        %v988 = vadd.f32 %v840, %v893
        %v989 = vadd.f32 %v843, %v900
        %v990 = vadd.f32 %v846, %v904
        %v991 = vadd.f32 %v849, %v911
        %v992 = vadd.f32 %v852, %v915
        %v993 = vadd.f32 %v855, %v922
        %v994 = vadd.f32 %v858, %v926
        %v995 = vadd.f32 %v861, %v933
        %v996 = vadd.f32 %v864, %v937
        %v997 = vadd.f32 %v867, %v944
        %v998 = vadd.f32 %v870, %v948
        %v999 = vadd.f32 %v873, %v955
        %v1000 = vadd.f32 %v876, %v959
        %v1001 = vadd.f32 %v879, %v966
        %v1002 = vadd.f32 %v882, %v970
        %v1003 = vxor.u32 %v987, 2147483648
        %v1004 = vxor.u32 %v988, 2147483648
        %v1005 = vxor.u32 %v989, 2147483648
        %v1006 = vxor.u32 %v990, 2147483648
        %v1007 = vxor.u32 %v991, 2147483648
        %v1008 = vxor.u32 %v992, 2147483648
        %v1009 = vxor.u32 %v993, 2147483648
        %v1010 = vxor.u32 %v994, 2147483648
        %v1011 = vxor.u32 %v995, 2147483648
        %v1012 = vxor.u32 %v996, 2147483648
        %v1013 = vxor.u32 %v997, 2147483648
        %v1014 = vxor.u32 %v998, 2147483648
        %v1015 = vxor.u32 %v999, 2147483648
        %v1016 = vxor.u32 %v1000, 2147483648
        %v1017 = vxor.u32 %v1001, 2147483648
        %v1018 = vxor.u32 %v1002, 2147483648
        %v1019 = vmul.f32 %v1003, 1.442695
        %v1020 = vpow.pop %v1019
        %v1021 = vmul.f32 %v1004, 1.442695
        %v1022 = vpow.pop %v1021
        %v1023 = vmul.f32 %v1005, 1.442695
        %v1024 = vpow.pop %v1023
        %v1025 = vmul.f32 %v1006, 1.442695
        %v1026 = vpow.pop %v1025
        %v1027 = vmul.f32 %v1007, 1.442695
        %v1028 = vpow.pop %v1027
        %v1029 = vmul.f32 %v1008, 1.442695
        %v1030 = vpow.pop %v1029
        %v1031 = vmul.f32 %v1009, 1.442695
        %v1032 = vpow.pop %v1031
        %v1033 = vmul.f32 %v1010, 1.442695
        %v1034 = vpow.pop %v1033
        %v1035 = vmul.f32 %v1011, 1.442695
        %v1036 = vpow.pop %v1035
        %v1037 = vmul.f32 %v1012, 1.442695
        %v1038 = vpow.pop %v1037
        %v1039 = vmul.f32 %v1013, 1.442695
        %v1040 = vpow.pop %v1039
        %v1041 = vmul.f32 %v1014, 1.442695
        %v1042 = vpow.pop %v1041
        %v1043 = vmul.f32 %v1015, 1.442695
        %v1044 = vpow.pop %v1043
        %v1045 = vmul.f32 %v1016, 1.442695
        %v1046 = vpow.pop %v1045
        %v1047 = vmul.f32 %v1017, 1.442695
        %v1048 = vpow.pop %v1047
        %v1049 = vmul.f32 %v1018, 1.442695
        %v1050 = vpow.pop %v1049
        %v1051 = vadd.f32 %v1020, 1.0
        %v1052 = vadd.f32 %v1022, 1.0
        %v1053 = vadd.f32 %v1024, 1.0
        %v1054 = vadd.f32 %v1026, 1.0
        %v1055 = vadd.f32 %v1028, 1.0
        %v1056 = vadd.f32 %v1030, 1.0
        %v1057 = vadd.f32 %v1032, 1.0
        %v1058 = vadd.f32 %v1034, 1.0
        %v1059 = vadd.f32 %v1036, 1.0
        %v1060 = vadd.f32 %v1038, 1.0
        %v1061 = vadd.f32 %v1040, 1.0
        %v1062 = vadd.f32 %v1042, 1.0
        %v1063 = vadd.f32 %v1044, 1.0
        %v1064 = vadd.f32 %v1046, 1.0
        %v1065 = vadd.f32 %v1048, 1.0
        %v1066 = vadd.f32 %v1050, 1.0
        %v1067 = vrcp.pop %v1051
        %v1068 = vmul.f32 1.0, %v1067
        %v1069 = vrcp.pop %v1052
        %v1070 = vmul.f32 1.0, %v1069
        %v1071 = vrcp.pop %v1053
        %v1072 = vmul.f32 1.0, %v1071
        %v1073 = vrcp.pop %v1054
        %v1074 = vmul.f32 1.0, %v1073
        %v1075 = vrcp.pop %v1055
        %v1076 = vmul.f32 1.0, %v1075
        %v1077 = vrcp.pop %v1056
        %v1078 = vmul.f32 1.0, %v1077
        %v1079 = vrcp.pop %v1057
        %v1080 = vmul.f32 1.0, %v1079
        %v1081 = vrcp.pop %v1058
        %v1082 = vmul.f32 1.0, %v1081
        %v1083 = vrcp.pop %v1059
        %v1084 = vmul.f32 1.0, %v1083
        %v1085 = vrcp.pop %v1060
        %v1086 = vmul.f32 1.0, %v1085
        %v1087 = vrcp.pop %v1061
        %v1088 = vmul.f32 1.0, %v1087
        %v1089 = vrcp.pop %v1062
        %v1090 = vmul.f32 1.0, %v1089
        %v1091 = vrcp.pop %v1063
        %v1092 = vmul.f32 1.0, %v1091
        %v1093 = vrcp.pop %v1064
        %v1094 = vmul.f32 1.0, %v1093
        %v1095 = vrcp.pop %v1065
        %v1096 = vmul.f32 1.0, %v1095
        %v1097 = vrcp.pop %v1066
        %v1098 = vmul.f32 1.0, %v1097
        %1115 = vset.pattern.permute.xlu0 0
        %1116 = vperm.xlu0 %1115, %v1068
        %v1117 = vpop.permute.xlu0 %1116
        %1118 = vset.pattern.permute.xlu0 0
        %1119 = vperm.xlu0 %1118, %v1070
        %v1120 = vpop.permute.xlu0 %1119
        %1121 = vset.pattern.permute.xlu0 0
        %1122 = vperm.xlu0 %1121, %v1072
        %v1123 = vpop.permute.xlu0 %1122
        %1124 = vset.pattern.permute.xlu0 0
        %1125 = vperm.xlu0 %1124, %v1074
        %v1126 = vpop.permute.xlu0 %1125
        %1127 = vset.pattern.permute.xlu0 0
        %1128 = vperm.xlu0 %1127, %v1076
        %v1129 = vpop.permute.xlu0 %1128
        %1130 = vset.pattern.permute.xlu0 0
        %1131 = vperm.xlu0 %1130, %v1078
        %v1132 = vpop.permute.xlu0 %1131
        %1133 = vset.pattern.permute.xlu0 0
        %1134 = vperm.xlu0 %1133, %v1080
        %v1135 = vpop.permute.xlu0 %1134
        %1136 = vset.pattern.permute.xlu0 0
        %1137 = vperm.xlu0 %1136, %v1082
        %v1138 = vpop.permute.xlu0 %1137
        %1139 = vset.pattern.permute.xlu0 0
        %1140 = vperm.xlu0 %1139, %v1084
        %v1141 = vpop.permute.xlu0 %1140
        %1142 = vset.pattern.permute.xlu0 0
        %1143 = vperm.xlu0 %1142, %v1086
        %v1144 = vpop.permute.xlu0 %1143
        %1145 = vset.pattern.permute.xlu0 0
        %1146 = vperm.xlu0 %1145, %v1088
        %v1147 = vpop.permute.xlu0 %1146
        %1148 = vset.pattern.permute.xlu0 0
        %1149 = vperm.xlu0 %1148, %v1090
        %v1150 = vpop.permute.xlu0 %1149
        %1151 = vset.pattern.permute.xlu0 0
        %1152 = vperm.xlu0 %1151, %v1092
        %v1153 = vpop.permute.xlu0 %1152
        %1154 = vset.pattern.permute.xlu0 0
        %1155 = vperm.xlu0 %1154, %v1094
        %v1156 = vpop.permute.xlu0 %1155
        %1157 = vset.pattern.permute.xlu0 0
        %1158 = vperm.xlu0 %1157, %v1096
        %v1159 = vpop.permute.xlu0 %1158
        %1160 = vset.pattern.permute.xlu0 0
        %1161 = vperm.xlu0 %1160, %v1098
        %v1162 = vpop.permute.xlu0 %1161
        %v1163 = vlaneseq
        %v1164 = vshrl.u32 %v1163, 7
        %v1165 = vsub.s32 %v680, %v1164
        %v1166 = vrot.slane %v1117, %v1165
        %v1167 = vlaneseq
        %v1168 = vshrl.u32 %v1167, 7
        %v1169 = vsub.s32 %v685, %v1168
        %v1170 = vrot.slane %v1120, %v1169
        %v1171 = vsel %vm690, %v1170, %v1166
        %v1172 = vlaneseq
        %v1173 = vshrl.u32 %v1172, 7
        %v1174 = vsub.s32 %v680, %v1173
        %v1175 = vrot.slane %v1123, %v1174
        %v1176 = vlaneseq
        %v1177 = vshrl.u32 %v1176, 7
        %v1178 = vsub.s32 %v685, %v1177
        %v1179 = vrot.slane %v1126, %v1178
        %v1180 = vsel %vm690, %v1179, %v1175
        %v1181 = vlaneseq
        %v1182 = vshrl.u32 %v1181, 7
        %v1183 = vsub.s32 %v680, %v1182
        %v1184 = vrot.slane %v1129, %v1183
        %v1185 = vlaneseq
        %v1186 = vshrl.u32 %v1185, 7
        %v1187 = vsub.s32 %v685, %v1186
        %v1188 = vrot.slane %v1132, %v1187
        %v1189 = vsel %vm690, %v1188, %v1184
        %v1190 = vlaneseq
        %v1191 = vshrl.u32 %v1190, 7
        %v1192 = vsub.s32 %v680, %v1191
        %v1193 = vrot.slane %v1135, %v1192
        %v1194 = vlaneseq
        %v1195 = vshrl.u32 %v1194, 7
        %v1196 = vsub.s32 %v685, %v1195
        %v1197 = vrot.slane %v1138, %v1196
        %v1198 = vsel %vm690, %v1197, %v1193
        %v1199 = vlaneseq
        %v1200 = vshrl.u32 %v1199, 7
        %v1201 = vsub.s32 %v680, %v1200
        %v1202 = vrot.slane %v1141, %v1201
        %v1203 = vlaneseq
        %v1204 = vshrl.u32 %v1203, 7
        %v1205 = vsub.s32 %v685, %v1204
        %v1206 = vrot.slane %v1144, %v1205
        %v1207 = vsel %vm690, %v1206, %v1202
        %v1208 = vlaneseq
        %v1209 = vshrl.u32 %v1208, 7
        %v1210 = vsub.s32 %v680, %v1209
        %v1211 = vrot.slane %v1147, %v1210
        %v1212 = vlaneseq
        %v1213 = vshrl.u32 %v1212, 7
        %v1214 = vsub.s32 %v685, %v1213
        %v1215 = vrot.slane %v1150, %v1214
        %v1216 = vsel %vm690, %v1215, %v1211
        %v1217 = vlaneseq
        %v1218 = vshrl.u32 %v1217, 7
        %v1219 = vsub.s32 %v680, %v1218
        %v1220 = vrot.slane %v1153, %v1219
        %v1221 = vlaneseq
        %v1222 = vshrl.u32 %v1221, 7
        %v1223 = vsub.s32 %v685, %v1222
        %v1224 = vrot.slane %v1156, %v1223
        %v1225 = vsel %vm690, %v1224, %v1220
        %v1226 = vlaneseq
        %v1227 = vshrl.u32 %v1226, 7
        %v1228 = vsub.s32 %v680, %v1227
        %v1229 = vrot.slane %v1159, %v1228
        %v1230 = vlaneseq
        %v1231 = vshrl.u32 %v1230, 7
        %v1232 = vsub.s32 %v685, %v1231
        %v1233 = vrot.slane %v1162, %v1232
        %v1234 = vsel %vm690, %v1233, %v1229
        %v1235 = vsel %vm756, %v1171, %v1171
        %v1236 = vsel %vm758, %v1171, %v1235
        %v1237 = vsel %vm760, %v1171, %v1236
        %v1238 = vsel %vm762, %v1171, %v1237
        %v1239 = vsel %vm764, %v1171, %v1238
        %v1240 = vsel %vm766, %v1171, %v1239
        %v1241 = vsel %vm756, %v1180, %v1180
        %v1242 = vsel %vm758, %v1180, %v1241
        %v1243 = vsel %vm760, %v1180, %v1242
        %v1244 = vsel %vm762, %v1180, %v1243
        %v1245 = vsel %vm764, %v1180, %v1244
        %v1246 = vsel %vm766, %v1180, %v1245
        %v1247 = vsel %vm756, %v1189, %v1189
        %v1248 = vsel %vm758, %v1189, %v1247
        %v1249 = vsel %vm760, %v1189, %v1248
        %v1250 = vsel %vm762, %v1189, %v1249
        %v1251 = vsel %vm764, %v1189, %v1250
        %v1252 = vsel %vm766, %v1189, %v1251
        %v1253 = vsel %vm756, %v1198, %v1198
        %v1254 = vsel %vm758, %v1198, %v1253
        %v1255 = vsel %vm760, %v1198, %v1254
        %v1256 = vsel %vm762, %v1198, %v1255
        %v1257 = vsel %vm764, %v1198, %v1256
        %v1258 = vsel %vm766, %v1198, %v1257
        %v1259 = vsel %vm756, %v1207, %v1207
        %v1260 = vsel %vm758, %v1207, %v1259
        %v1261 = vsel %vm760, %v1207, %v1260
        %v1262 = vsel %vm762, %v1207, %v1261
        %v1263 = vsel %vm764, %v1207, %v1262
        %v1264 = vsel %vm766, %v1207, %v1263
        %v1265 = vsel %vm756, %v1216, %v1216
        %v1266 = vsel %vm758, %v1216, %v1265
        %v1267 = vsel %vm760, %v1216, %v1266
        %v1268 = vsel %vm762, %v1216, %v1267
        %v1269 = vsel %vm764, %v1216, %v1268
        %v1270 = vsel %vm766, %v1216, %v1269
        %v1271 = vsel %vm756, %v1225, %v1225
        %v1272 = vsel %vm758, %v1225, %v1271
        %v1273 = vsel %vm760, %v1225, %v1272
        %v1274 = vsel %vm762, %v1225, %v1273
        %v1275 = vsel %vm764, %v1225, %v1274
        %v1276 = vsel %vm766, %v1225, %v1275
        %v1277 = vsel %vm756, %v1234, %v1234
        %v1278 = vsel %vm758, %v1234, %v1277
        %v1279 = vsel %vm760, %v1234, %v1278
        %v1280 = vsel %vm762, %v1234, %v1279
        %v1281 = vsel %vm764, %v1234, %v1280
        %v1282 = vsel %vm766, %v1234, %v1281
        %v1291 = vmul.f32 %v168, %v1240
        %v1292 = vmul.f32 %v169, %v1240
        %v1293 = vmul.f32 %v177, %v1246
        %v1294 = vmul.f32 %v178, %v1246
        %v1295 = vmul.f32 %v186, %v1252
        %v1296 = vmul.f32 %v187, %v1252
        %v1297 = vmul.f32 %v195, %v1258
        %v1298 = vmul.f32 %v196, %v1258
        %v1299 = vmul.f32 %v204, %v1264
        %v1300 = vmul.f32 %v205, %v1264
        %v1301 = vmul.f32 %v213, %v1270
        %v1302 = vmul.f32 %v214, %v1270
        %v1303 = vmul.f32 %v222, %v1276
        %v1304 = vmul.f32 %v223, %v1276
        %v1305 = vmul.f32 %v231, %v1282
        %v1306 = vmul.f32 %v232, %v1282
        %v1307 = vsel %vm834, %v1291, 0.0
        %1308 = vadd.xlane.f32.xlu0 %v1307
        %v1309 = vpop.xlane.xlu0 %1308
        %v1310 = vsel %vm834, %v1292, 0.0
        %1311 = vadd.xlane.f32.xlu0 %v1310
        %v1312 = vpop.xlane.xlu0 %1311
        %v1313 = vsel %vm834, %v1293, 0.0
        %1314 = vadd.xlane.f32.xlu0 %v1313
        %v1315 = vpop.xlane.xlu0 %1314
        %v1316 = vsel %vm834, %v1294, 0.0
        %1317 = vadd.xlane.f32.xlu0 %v1316
        %v1318 = vpop.xlane.xlu0 %1317
        %v1319 = vsel %vm834, %v1295, 0.0
        %1320 = vadd.xlane.f32.xlu0 %v1319
        %v1321 = vpop.xlane.xlu0 %1320
        %v1322 = vsel %vm834, %v1296, 0.0
        %1323 = vadd.xlane.f32.xlu0 %v1322
        %v1324 = vpop.xlane.xlu0 %1323
        %v1325 = vsel %vm834, %v1297, 0.0
        %1326 = vadd.xlane.f32.xlu0 %v1325
        %v1327 = vpop.xlane.xlu0 %1326
        %v1328 = vsel %vm834, %v1298, 0.0
        %1329 = vadd.xlane.f32.xlu0 %v1328
        %v1330 = vpop.xlane.xlu0 %1329
        %v1331 = vsel %vm834, %v1299, 0.0
        %1332 = vadd.xlane.f32.xlu0 %v1331
        %v1333 = vpop.xlane.xlu0 %1332
        %v1334 = vsel %vm834, %v1300, 0.0
        %1335 = vadd.xlane.f32.xlu0 %v1334
        %v1336 = vpop.xlane.xlu0 %1335
        %v1337 = vsel %vm834, %v1301, 0.0
        %1338 = vadd.xlane.f32.xlu0 %v1337
        %v1339 = vpop.xlane.xlu0 %1338
        %v1340 = vsel %vm834, %v1302, 0.0
        %1341 = vadd.xlane.f32.xlu0 %v1340
        %v1342 = vpop.xlane.xlu0 %1341
        %v1343 = vsel %vm834, %v1303, 0.0
        %1344 = vadd.xlane.f32.xlu0 %v1343
        %v1345 = vpop.xlane.xlu0 %1344
        %v1346 = vsel %vm834, %v1304, 0.0
        %1347 = vadd.xlane.f32.xlu0 %v1346
        %v1348 = vpop.xlane.xlu0 %1347
        %v1349 = vsel %vm834, %v1305, 0.0
        %1350 = vadd.xlane.f32.xlu0 %v1349
        %v1351 = vpop.xlane.xlu0 %1350
        %v1352 = vsel %vm834, %v1306, 0.0
        %1353 = vadd.xlane.f32.xlu0 %v1352
        %v1354 = vpop.xlane.xlu0 %1353
        %v1355 = vlaneseq
        %v1356 = vshrl.u32 %v1355, 7
        %v1357 = vsub.s32 3, %v1356
        %v1358 = vrot.slane %v172, %v1357
        %1360 = vbcast.lane.b32.xlu0 %v1358, 256
        %v1361 = vpop.permute.xlu0 %1360
        %s1363 = sor.u32 256, 8
        %1364 = vbcast.lane.b32.xlu0 %v1358, %s1363
        %v1365 = vpop.permute.xlu0 %1364
        %v1366 = vlaneseq
        %v1367 = vshrl.u32 %v1366, 7
        %v1368 = vsub.s32 3, %v1367
        %v1369 = vrot.slane %v181, %v1368
        %1371 = vbcast.lane.b32.xlu0 %v1369, 256
        %v1372 = vpop.permute.xlu0 %1371
        %s1374 = sor.u32 256, 8
        %1375 = vbcast.lane.b32.xlu0 %v1369, %s1374
        %v1376 = vpop.permute.xlu0 %1375
        %v1377 = vlaneseq
        %v1378 = vshrl.u32 %v1377, 7
        %v1379 = vsub.s32 3, %v1378
        %v1380 = vrot.slane %v190, %v1379
        %1382 = vbcast.lane.b32.xlu0 %v1380, 256
        %v1383 = vpop.permute.xlu0 %1382
        %s1385 = sor.u32 256, 8
        %1386 = vbcast.lane.b32.xlu0 %v1380, %s1385
        %v1387 = vpop.permute.xlu0 %1386
        %v1388 = vlaneseq
        %v1389 = vshrl.u32 %v1388, 7
        %v1390 = vsub.s32 3, %v1389
        %v1391 = vrot.slane %v199, %v1390
        %1393 = vbcast.lane.b32.xlu0 %v1391, 256
        %v1394 = vpop.permute.xlu0 %1393
        %s1396 = sor.u32 256, 8
        %1397 = vbcast.lane.b32.xlu0 %v1391, %s1396
        %v1398 = vpop.permute.xlu0 %1397
        %v1399 = vlaneseq
        %v1400 = vshrl.u32 %v1399, 7
        %v1401 = vsub.s32 3, %v1400
        %v1402 = vrot.slane %v208, %v1401
        %1404 = vbcast.lane.b32.xlu0 %v1402, 256
        %v1405 = vpop.permute.xlu0 %1404
        %s1407 = sor.u32 256, 8
        %1408 = vbcast.lane.b32.xlu0 %v1402, %s1407
        %v1409 = vpop.permute.xlu0 %1408
        %v1410 = vlaneseq
        %v1411 = vshrl.u32 %v1410, 7
        %v1412 = vsub.s32 3, %v1411
        %v1413 = vrot.slane %v217, %v1412
        %1415 = vbcast.lane.b32.xlu0 %v1413, 256
        %v1416 = vpop.permute.xlu0 %1415
        %s1418 = sor.u32 256, 8
        %1419 = vbcast.lane.b32.xlu0 %v1413, %s1418
        %v1420 = vpop.permute.xlu0 %1419
        %v1421 = vlaneseq
        %v1422 = vshrl.u32 %v1421, 7
        %v1423 = vsub.s32 3, %v1422
        %v1424 = vrot.slane %v226, %v1423
        %1426 = vbcast.lane.b32.xlu0 %v1424, 256
        %v1427 = vpop.permute.xlu0 %1426
        %s1429 = sor.u32 256, 8
        %1430 = vbcast.lane.b32.xlu0 %v1424, %s1429
        %v1431 = vpop.permute.xlu0 %1430
        %v1432 = vlaneseq
        %v1433 = vshrl.u32 %v1432, 7
        %v1434 = vsub.s32 3, %v1433
        %v1435 = vrot.slane %v235, %v1434
        %1437 = vbcast.lane.b32.xlu0 %v1435, 256
        %v1438 = vpop.permute.xlu0 %1437
        %s1440 = sor.u32 256, 8
        %1441 = vbcast.lane.b32.xlu0 %v1435, %s1440
        %v1442 = vpop.permute.xlu0 %1441
        %v1459 = vadd.f32 %v1309, %v1361
        %v1460 = vadd.f32 %v1312, %v1365
        %v1461 = vadd.f32 %v1315, %v1372
        %v1462 = vadd.f32 %v1318, %v1376
        %v1463 = vadd.f32 %v1321, %v1383
        %v1464 = vadd.f32 %v1324, %v1387
        %v1465 = vadd.f32 %v1327, %v1394
        %v1466 = vadd.f32 %v1330, %v1398
        %v1467 = vadd.f32 %v1333, %v1405
        %v1468 = vadd.f32 %v1336, %v1409
        %v1469 = vadd.f32 %v1339, %v1416
        %v1470 = vadd.f32 %v1342, %v1420
        %v1471 = vadd.f32 %v1345, %v1427
        %v1472 = vadd.f32 %v1348, %v1431
        %v1473 = vadd.f32 %v1351, %v1438
        %v1474 = vadd.f32 %v1354, %v1442
        %v1475 = vxor.u32 %v1459, 2147483648
        %v1476 = vxor.u32 %v1460, 2147483648
        %v1477 = vxor.u32 %v1461, 2147483648
        %v1478 = vxor.u32 %v1462, 2147483648
        %v1479 = vxor.u32 %v1463, 2147483648
        %v1480 = vxor.u32 %v1464, 2147483648
        %v1481 = vxor.u32 %v1465, 2147483648
        %v1482 = vxor.u32 %v1466, 2147483648
        %v1483 = vxor.u32 %v1467, 2147483648
        %v1484 = vxor.u32 %v1468, 2147483648
        %v1485 = vxor.u32 %v1469, 2147483648
        %v1486 = vxor.u32 %v1470, 2147483648
        %v1487 = vxor.u32 %v1471, 2147483648
        %v1488 = vxor.u32 %v1472, 2147483648
        %v1489 = vxor.u32 %v1473, 2147483648
        %v1490 = vxor.u32 %v1474, 2147483648
        %v1491 = vmul.f32 %v1475, 1.442695
        %v1492 = vpow.pop %v1491
        %v1493 = vmul.f32 %v1476, 1.442695
        %v1494 = vpow.pop %v1493
        %v1495 = vmul.f32 %v1477, 1.442695
        %v1496 = vpow.pop %v1495
        %v1497 = vmul.f32 %v1478, 1.442695
        %v1498 = vpow.pop %v1497
        %v1499 = vmul.f32 %v1479, 1.442695
        %v1500 = vpow.pop %v1499
        %v1501 = vmul.f32 %v1480, 1.442695
        %v1502 = vpow.pop %v1501
        %v1503 = vmul.f32 %v1481, 1.442695
        %v1504 = vpow.pop %v1503
        %v1505 = vmul.f32 %v1482, 1.442695
        %v1506 = vpow.pop %v1505
        %v1507 = vmul.f32 %v1483, 1.442695
        %v1508 = vpow.pop %v1507
        %v1509 = vmul.f32 %v1484, 1.442695
        %v1510 = vpow.pop %v1509
        %v1511 = vmul.f32 %v1485, 1.442695
        %v1512 = vpow.pop %v1511
        %v1513 = vmul.f32 %v1486, 1.442695
        %v1514 = vpow.pop %v1513
        %v1515 = vmul.f32 %v1487, 1.442695
        %v1516 = vpow.pop %v1515
        %v1517 = vmul.f32 %v1488, 1.442695
        %v1518 = vpow.pop %v1517
        %v1519 = vmul.f32 %v1489, 1.442695
        %v1520 = vpow.pop %v1519
        %v1521 = vmul.f32 %v1490, 1.442695
        %v1522 = vpow.pop %v1521
        %v1523 = vadd.f32 %v1492, 1.0
        %v1524 = vadd.f32 %v1494, 1.0
        %v1525 = vadd.f32 %v1496, 1.0
        %v1526 = vadd.f32 %v1498, 1.0
        %v1527 = vadd.f32 %v1500, 1.0
        %v1528 = vadd.f32 %v1502, 1.0
        %v1529 = vadd.f32 %v1504, 1.0
        %v1530 = vadd.f32 %v1506, 1.0
        %v1531 = vadd.f32 %v1508, 1.0
        %v1532 = vadd.f32 %v1510, 1.0
        %v1533 = vadd.f32 %v1512, 1.0
        %v1534 = vadd.f32 %v1514, 1.0
        %v1535 = vadd.f32 %v1516, 1.0
        %v1536 = vadd.f32 %v1518, 1.0
        %v1537 = vadd.f32 %v1520, 1.0
        %v1538 = vadd.f32 %v1522, 1.0
        %v1539 = vrcp.pop %v1523
        %v1540 = vmul.f32 1.0, %v1539
        %v1541 = vrcp.pop %v1524
        %v1542 = vmul.f32 1.0, %v1541
        %v1543 = vrcp.pop %v1525
        %v1544 = vmul.f32 1.0, %v1543
        %v1545 = vrcp.pop %v1526
        %v1546 = vmul.f32 1.0, %v1545
        %v1547 = vrcp.pop %v1527
        %v1548 = vmul.f32 1.0, %v1547
        %v1549 = vrcp.pop %v1528
        %v1550 = vmul.f32 1.0, %v1549
        %v1551 = vrcp.pop %v1529
        %v1552 = vmul.f32 1.0, %v1551
        %v1553 = vrcp.pop %v1530
        %v1554 = vmul.f32 1.0, %v1553
        %v1555 = vrcp.pop %v1531
        %v1556 = vmul.f32 1.0, %v1555
        %v1557 = vrcp.pop %v1532
        %v1558 = vmul.f32 1.0, %v1557
        %v1559 = vrcp.pop %v1533
        %v1560 = vmul.f32 1.0, %v1559
        %v1561 = vrcp.pop %v1534
        %v1562 = vmul.f32 1.0, %v1561
        %v1563 = vrcp.pop %v1535
        %v1564 = vmul.f32 1.0, %v1563
        %v1565 = vrcp.pop %v1536
        %v1566 = vmul.f32 1.0, %v1565
        %v1567 = vrcp.pop %v1537
        %v1568 = vmul.f32 1.0, %v1567
        %v1569 = vrcp.pop %v1538
        %v1570 = vmul.f32 1.0, %v1569
        %1587 = vset.pattern.permute.xlu0 0
        %1588 = vperm.xlu0 %1587, %v1540
        %v1589 = vpop.permute.xlu0 %1588
        %1590 = vset.pattern.permute.xlu0 0
        %1591 = vperm.xlu0 %1590, %v1542
        %v1592 = vpop.permute.xlu0 %1591
        %1593 = vset.pattern.permute.xlu0 0
        %1594 = vperm.xlu0 %1593, %v1544
        %v1595 = vpop.permute.xlu0 %1594
        %1596 = vset.pattern.permute.xlu0 0
        %1597 = vperm.xlu0 %1596, %v1546
        %v1598 = vpop.permute.xlu0 %1597
        %1599 = vset.pattern.permute.xlu0 0
        %1600 = vperm.xlu0 %1599, %v1548
        %v1601 = vpop.permute.xlu0 %1600
        %1602 = vset.pattern.permute.xlu0 0
        %1603 = vperm.xlu0 %1602, %v1550
        %v1604 = vpop.permute.xlu0 %1603
        %1605 = vset.pattern.permute.xlu0 0
        %1606 = vperm.xlu0 %1605, %v1552
        %v1607 = vpop.permute.xlu0 %1606
        %1608 = vset.pattern.permute.xlu0 0
        %1609 = vperm.xlu0 %1608, %v1554
        %v1610 = vpop.permute.xlu0 %1609
        %1611 = vset.pattern.permute.xlu0 0
        %1612 = vperm.xlu0 %1611, %v1556
        %v1613 = vpop.permute.xlu0 %1612
        %1614 = vset.pattern.permute.xlu0 0
        %1615 = vperm.xlu0 %1614, %v1558
        %v1616 = vpop.permute.xlu0 %1615
        %1617 = vset.pattern.permute.xlu0 0
        %1618 = vperm.xlu0 %1617, %v1560
        %v1619 = vpop.permute.xlu0 %1618
        %1620 = vset.pattern.permute.xlu0 0
        %1621 = vperm.xlu0 %1620, %v1562
        %v1622 = vpop.permute.xlu0 %1621
        %1623 = vset.pattern.permute.xlu0 0
        %1624 = vperm.xlu0 %1623, %v1564
        %v1625 = vpop.permute.xlu0 %1624
        %1626 = vset.pattern.permute.xlu0 0
        %1627 = vperm.xlu0 %1626, %v1566
        %v1628 = vpop.permute.xlu0 %1627
        %1629 = vset.pattern.permute.xlu0 0
        %1630 = vperm.xlu0 %1629, %v1568
        %v1631 = vpop.permute.xlu0 %1630
        %1632 = vset.pattern.permute.xlu0 0
        %1633 = vperm.xlu0 %1632, %v1570
        %v1634 = vpop.permute.xlu0 %1633
        %v1635 = vlaneseq
        %v1636 = vshrl.u32 %v1635, 7
        %v1637 = vsub.s32 %v680, %v1636
        %v1638 = vrot.slane %v1589, %v1637
        %v1639 = vlaneseq
        %v1640 = vshrl.u32 %v1639, 7
        %v1641 = vsub.s32 %v685, %v1640
        %v1642 = vrot.slane %v1592, %v1641
        %v1643 = vsel %vm690, %v1642, %v1638
        %v1644 = vlaneseq
        %v1645 = vshrl.u32 %v1644, 7
        %v1646 = vsub.s32 %v680, %v1645
        %v1647 = vrot.slane %v1595, %v1646
        %v1648 = vlaneseq
        %v1649 = vshrl.u32 %v1648, 7
        %v1650 = vsub.s32 %v685, %v1649
        %v1651 = vrot.slane %v1598, %v1650
        %v1652 = vsel %vm690, %v1651, %v1647
        %v1653 = vlaneseq
        %v1654 = vshrl.u32 %v1653, 7
        %v1655 = vsub.s32 %v680, %v1654
        %v1656 = vrot.slane %v1601, %v1655
        %v1657 = vlaneseq
        %v1658 = vshrl.u32 %v1657, 7
        %v1659 = vsub.s32 %v685, %v1658
        %v1660 = vrot.slane %v1604, %v1659
        %v1661 = vsel %vm690, %v1660, %v1656
        %v1662 = vlaneseq
        %v1663 = vshrl.u32 %v1662, 7
        %v1664 = vsub.s32 %v680, %v1663
        %v1665 = vrot.slane %v1607, %v1664
        %v1666 = vlaneseq
        %v1667 = vshrl.u32 %v1666, 7
        %v1668 = vsub.s32 %v685, %v1667
        %v1669 = vrot.slane %v1610, %v1668
        %v1670 = vsel %vm690, %v1669, %v1665
        %v1671 = vlaneseq
        %v1672 = vshrl.u32 %v1671, 7
        %v1673 = vsub.s32 %v680, %v1672
        %v1674 = vrot.slane %v1613, %v1673
        %v1675 = vlaneseq
        %v1676 = vshrl.u32 %v1675, 7
        %v1677 = vsub.s32 %v685, %v1676
        %v1678 = vrot.slane %v1616, %v1677
        %v1679 = vsel %vm690, %v1678, %v1674
        %v1680 = vlaneseq
        %v1681 = vshrl.u32 %v1680, 7
        %v1682 = vsub.s32 %v680, %v1681
        %v1683 = vrot.slane %v1619, %v1682
        %v1684 = vlaneseq
        %v1685 = vshrl.u32 %v1684, 7
        %v1686 = vsub.s32 %v685, %v1685
        %v1687 = vrot.slane %v1622, %v1686
        %v1688 = vsel %vm690, %v1687, %v1683
        %v1689 = vlaneseq
        %v1690 = vshrl.u32 %v1689, 7
        %v1691 = vsub.s32 %v680, %v1690
        %v1692 = vrot.slane %v1625, %v1691
        %v1693 = vlaneseq
        %v1694 = vshrl.u32 %v1693, 7
        %v1695 = vsub.s32 %v685, %v1694
        %v1696 = vrot.slane %v1628, %v1695
        %v1697 = vsel %vm690, %v1696, %v1692
        %v1698 = vlaneseq
        %v1699 = vshrl.u32 %v1698, 7
        %v1700 = vsub.s32 %v680, %v1699
        %v1701 = vrot.slane %v1631, %v1700
        %v1702 = vlaneseq
        %v1703 = vshrl.u32 %v1702, 7
        %v1704 = vsub.s32 %v685, %v1703
        %v1705 = vrot.slane %v1634, %v1704
        %v1706 = vsel %vm690, %v1705, %v1701
        %v1707 = vsel %vm756, %v1643, %v1643
        %v1708 = vsel %vm758, %v1643, %v1707
        %v1709 = vsel %vm760, %v1643, %v1708
        %v1710 = vsel %vm762, %v1643, %v1709
        %v1711 = vsel %vm764, %v1643, %v1710
        %v1712 = vsel %vm766, %v1643, %v1711
        %v1713 = vsel %vm756, %v1652, %v1652
        %v1714 = vsel %vm758, %v1652, %v1713
        %v1715 = vsel %vm760, %v1652, %v1714
        %v1716 = vsel %vm762, %v1652, %v1715
        %v1717 = vsel %vm764, %v1652, %v1716
        %v1718 = vsel %vm766, %v1652, %v1717
        %v1719 = vsel %vm756, %v1661, %v1661
        %v1720 = vsel %vm758, %v1661, %v1719
        %v1721 = vsel %vm760, %v1661, %v1720
        %v1722 = vsel %vm762, %v1661, %v1721
        %v1723 = vsel %vm764, %v1661, %v1722
        %v1724 = vsel %vm766, %v1661, %v1723
        %v1725 = vsel %vm756, %v1670, %v1670
        %v1726 = vsel %vm758, %v1670, %v1725
        %v1727 = vsel %vm760, %v1670, %v1726
        %v1728 = vsel %vm762, %v1670, %v1727
        %v1729 = vsel %vm764, %v1670, %v1728
        %v1730 = vsel %vm766, %v1670, %v1729
        %v1731 = vsel %vm756, %v1679, %v1679
        %v1732 = vsel %vm758, %v1679, %v1731
        %v1733 = vsel %vm760, %v1679, %v1732
        %v1734 = vsel %vm762, %v1679, %v1733
        %v1735 = vsel %vm764, %v1679, %v1734
        %v1736 = vsel %vm766, %v1679, %v1735
        %v1737 = vsel %vm756, %v1688, %v1688
        %v1738 = vsel %vm758, %v1688, %v1737
        %v1739 = vsel %vm760, %v1688, %v1738
        %v1740 = vsel %vm762, %v1688, %v1739
        %v1741 = vsel %vm764, %v1688, %v1740
        %v1742 = vsel %vm766, %v1688, %v1741
        %v1743 = vsel %vm756, %v1697, %v1697
        %v1744 = vsel %vm758, %v1697, %v1743
        %v1745 = vsel %vm760, %v1697, %v1744
        %v1746 = vsel %vm762, %v1697, %v1745
        %v1747 = vsel %vm764, %v1697, %v1746
        %v1748 = vsel %vm766, %v1697, %v1747
        %v1749 = vsel %vm756, %v1706, %v1706
        %v1750 = vsel %vm758, %v1706, %v1749
        %v1751 = vsel %vm760, %v1706, %v1750
        %v1752 = vsel %vm762, %v1706, %v1751
        %v1753 = vsel %vm764, %v1706, %v1752
        %v1754 = vsel %vm766, %v1706, %v1753
        %v1763 = vmul.f32 %v170, %v1712
        %v1764 = vmul.f32 %v171, %v1712
        %v1765 = vmul.f32 %v179, %v1718
        %v1766 = vmul.f32 %v180, %v1718
        %v1767 = vmul.f32 %v188, %v1724
        %v1768 = vmul.f32 %v189, %v1724
        %v1769 = vmul.f32 %v197, %v1730
        %v1770 = vmul.f32 %v198, %v1730
        %v1771 = vmul.f32 %v206, %v1736
        %v1772 = vmul.f32 %v207, %v1736
        %v1773 = vmul.f32 %v215, %v1742
        %v1774 = vmul.f32 %v216, %v1742
        %v1775 = vmul.f32 %v224, %v1748
        %v1776 = vmul.f32 %v225, %v1748
        %v1777 = vmul.f32 %v233, %v1754
        %v1778 = vmul.f32 %v234, %v1754
        %v1779 = vsel %vm834, %v1763, 0.0
        %1780 = vadd.xlane.f32.xlu0 %v1779
        %v1781 = vpop.xlane.xlu0 %1780
        %v1782 = vsel %vm834, %v1764, 0.0
        %1783 = vadd.xlane.f32.xlu0 %v1782
        %v1784 = vpop.xlane.xlu0 %1783
        %v1785 = vsel %vm834, %v1765, 0.0
        %1786 = vadd.xlane.f32.xlu0 %v1785
        %v1787 = vpop.xlane.xlu0 %1786
        %v1788 = vsel %vm834, %v1766, 0.0
        %1789 = vadd.xlane.f32.xlu0 %v1788
        %v1790 = vpop.xlane.xlu0 %1789
        %v1791 = vsel %vm834, %v1767, 0.0
        %1792 = vadd.xlane.f32.xlu0 %v1791
        %v1793 = vpop.xlane.xlu0 %1792
        %v1794 = vsel %vm834, %v1768, 0.0
        %1795 = vadd.xlane.f32.xlu0 %v1794
        %v1796 = vpop.xlane.xlu0 %1795
        %v1797 = vsel %vm834, %v1769, 0.0
        %1798 = vadd.xlane.f32.xlu0 %v1797
        %v1799 = vpop.xlane.xlu0 %1798
        %v1800 = vsel %vm834, %v1770, 0.0
        %1801 = vadd.xlane.f32.xlu0 %v1800
        %v1802 = vpop.xlane.xlu0 %1801
        %v1803 = vsel %vm834, %v1771, 0.0
        %1804 = vadd.xlane.f32.xlu0 %v1803
        %v1805 = vpop.xlane.xlu0 %1804
        %v1806 = vsel %vm834, %v1772, 0.0
        %1807 = vadd.xlane.f32.xlu0 %v1806
        %v1808 = vpop.xlane.xlu0 %1807
        %v1809 = vsel %vm834, %v1773, 0.0
        %1810 = vadd.xlane.f32.xlu0 %v1809
        %v1811 = vpop.xlane.xlu0 %1810
        %v1812 = vsel %vm834, %v1774, 0.0
        %1813 = vadd.xlane.f32.xlu0 %v1812
        %v1814 = vpop.xlane.xlu0 %1813
        %v1815 = vsel %vm834, %v1775, 0.0
        %1816 = vadd.xlane.f32.xlu0 %v1815
        %v1817 = vpop.xlane.xlu0 %1816
        %v1818 = vsel %vm834, %v1776, 0.0
        %1819 = vadd.xlane.f32.xlu0 %v1818
        %v1820 = vpop.xlane.xlu0 %1819
        %v1821 = vsel %vm834, %v1777, 0.0
        %1822 = vadd.xlane.f32.xlu0 %v1821
        %v1823 = vpop.xlane.xlu0 %1822
        %v1824 = vsel %vm834, %v1778, 0.0
        %1825 = vadd.xlane.f32.xlu0 %v1824
        %v1826 = vpop.xlane.xlu0 %1825
        %v1827 = vlaneseq
        %v1828 = vshrl.u32 %v1827, 7
        %v1829 = vsub.s32 4, %v1828
        %v1830 = vrot.slane %v172, %v1829
        %1832 = vbcast.lane.b32.xlu0 %v1830, 256
        %v1833 = vpop.permute.xlu0 %1832
        %s1835 = sor.u32 256, 8
        %1836 = vbcast.lane.b32.xlu0 %v1830, %s1835
        %v1837 = vpop.permute.xlu0 %1836
        %v1838 = vlaneseq
        %v1839 = vshrl.u32 %v1838, 7
        %v1840 = vsub.s32 4, %v1839
        %v1841 = vrot.slane %v181, %v1840
        %1843 = vbcast.lane.b32.xlu0 %v1841, 256
        %v1844 = vpop.permute.xlu0 %1843
        %s1846 = sor.u32 256, 8
        %1847 = vbcast.lane.b32.xlu0 %v1841, %s1846
        %v1848 = vpop.permute.xlu0 %1847
        %v1849 = vlaneseq
        %v1850 = vshrl.u32 %v1849, 7
        %v1851 = vsub.s32 4, %v1850
        %v1852 = vrot.slane %v190, %v1851
        %1854 = vbcast.lane.b32.xlu0 %v1852, 256
        %v1855 = vpop.permute.xlu0 %1854
        %s1857 = sor.u32 256, 8
        %1858 = vbcast.lane.b32.xlu0 %v1852, %s1857
        %v1859 = vpop.permute.xlu0 %1858
        %v1860 = vlaneseq
        %v1861 = vshrl.u32 %v1860, 7
        %v1862 = vsub.s32 4, %v1861
        %v1863 = vrot.slane %v199, %v1862
        %1865 = vbcast.lane.b32.xlu0 %v1863, 256
        %v1866 = vpop.permute.xlu0 %1865
        %s1868 = sor.u32 256, 8
        %1869 = vbcast.lane.b32.xlu0 %v1863, %s1868
        %v1870 = vpop.permute.xlu0 %1869
        %v1871 = vlaneseq
        %v1872 = vshrl.u32 %v1871, 7
        %v1873 = vsub.s32 4, %v1872
        %v1874 = vrot.slane %v208, %v1873
        %1876 = vbcast.lane.b32.xlu0 %v1874, 256
        %v1877 = vpop.permute.xlu0 %1876
        %s1879 = sor.u32 256, 8
        %1880 = vbcast.lane.b32.xlu0 %v1874, %s1879
        %v1881 = vpop.permute.xlu0 %1880
        %v1882 = vlaneseq
        %v1883 = vshrl.u32 %v1882, 7
        %v1884 = vsub.s32 4, %v1883
        %v1885 = vrot.slane %v217, %v1884
        %1887 = vbcast.lane.b32.xlu0 %v1885, 256
        %v1888 = vpop.permute.xlu0 %1887
        %s1890 = sor.u32 256, 8
        %1891 = vbcast.lane.b32.xlu0 %v1885, %s1890
        %v1892 = vpop.permute.xlu0 %1891
        %v1893 = vlaneseq
        %v1894 = vshrl.u32 %v1893, 7
        %v1895 = vsub.s32 4, %v1894
        %v1896 = vrot.slane %v226, %v1895
        %1898 = vbcast.lane.b32.xlu0 %v1896, 256
        %v1899 = vpop.permute.xlu0 %1898
        %s1901 = sor.u32 256, 8
        %1902 = vbcast.lane.b32.xlu0 %v1896, %s1901
        %v1903 = vpop.permute.xlu0 %1902
        %v1904 = vlaneseq
        %v1905 = vshrl.u32 %v1904, 7
        %v1906 = vsub.s32 4, %v1905
        %v1907 = vrot.slane %v235, %v1906
        %1909 = vbcast.lane.b32.xlu0 %v1907, 256
        %v1910 = vpop.permute.xlu0 %1909
        %s1912 = sor.u32 256, 8
        %1913 = vbcast.lane.b32.xlu0 %v1907, %s1912
        %v1914 = vpop.permute.xlu0 %1913
        %v1931 = vadd.f32 %v1781, %v1833
        %v1932 = vadd.f32 %v1784, %v1837
        %v1933 = vadd.f32 %v1787, %v1844
        %v1934 = vadd.f32 %v1790, %v1848
        %v1935 = vadd.f32 %v1793, %v1855
        %v1936 = vadd.f32 %v1796, %v1859
        %v1937 = vadd.f32 %v1799, %v1866
        %v1938 = vadd.f32 %v1802, %v1870
        %v1939 = vadd.f32 %v1805, %v1877
        %v1940 = vadd.f32 %v1808, %v1881
        %v1941 = vadd.f32 %v1811, %v1888
        %v1942 = vadd.f32 %v1814, %v1892
        %v1943 = vadd.f32 %v1817, %v1899
        %v1944 = vadd.f32 %v1820, %v1903
        %v1945 = vadd.f32 %v1823, %v1910
        %v1946 = vadd.f32 %v1826, %v1914
        %v1947 = vxor.u32 %v1931, 2147483648
        %v1948 = vxor.u32 %v1932, 2147483648
        %v1949 = vxor.u32 %v1933, 2147483648
        %v1950 = vxor.u32 %v1934, 2147483648
        %v1951 = vxor.u32 %v1935, 2147483648
        %v1952 = vxor.u32 %v1936, 2147483648
        %v1953 = vxor.u32 %v1937, 2147483648
        %v1954 = vxor.u32 %v1938, 2147483648
        %v1955 = vxor.u32 %v1939, 2147483648
        %v1956 = vxor.u32 %v1940, 2147483648
        %v1957 = vxor.u32 %v1941, 2147483648
        %v1958 = vxor.u32 %v1942, 2147483648
        %v1959 = vxor.u32 %v1943, 2147483648
        %v1960 = vxor.u32 %v1944, 2147483648
        %v1961 = vxor.u32 %v1945, 2147483648
        %v1962 = vxor.u32 %v1946, 2147483648
        %v1963 = vmul.f32 %v1947, 1.442695
        %v1964 = vpow.pop %v1963
        %v1965 = vmul.f32 %v1948, 1.442695
        %v1966 = vpow.pop %v1965
        %v1967 = vmul.f32 %v1949, 1.442695
        %v1968 = vpow.pop %v1967
        %v1969 = vmul.f32 %v1950, 1.442695
        %v1970 = vpow.pop %v1969
        %v1971 = vmul.f32 %v1951, 1.442695
        %v1972 = vpow.pop %v1971
        %v1973 = vmul.f32 %v1952, 1.442695
        %v1974 = vpow.pop %v1973
        %v1975 = vmul.f32 %v1953, 1.442695
        %v1976 = vpow.pop %v1975
        %v1977 = vmul.f32 %v1954, 1.442695
        %v1978 = vpow.pop %v1977
        %v1979 = vmul.f32 %v1955, 1.442695
        %v1980 = vpow.pop %v1979
        %v1981 = vmul.f32 %v1956, 1.442695
        %v1982 = vpow.pop %v1981
        %v1983 = vmul.f32 %v1957, 1.442695
        %v1984 = vpow.pop %v1983
        %v1985 = vmul.f32 %v1958, 1.442695
        %v1986 = vpow.pop %v1985
        %v1987 = vmul.f32 %v1959, 1.442695
        %v1988 = vpow.pop %v1987
        %v1989 = vmul.f32 %v1960, 1.442695
        %v1990 = vpow.pop %v1989
        %v1991 = vmul.f32 %v1961, 1.442695
        %v1992 = vpow.pop %v1991
        %v1993 = vmul.f32 %v1962, 1.442695
        %v1994 = vpow.pop %v1993
        %v1995 = vadd.f32 %v1964, 1.0
        %v1996 = vadd.f32 %v1966, 1.0
        %v1997 = vadd.f32 %v1968, 1.0
        %v1998 = vadd.f32 %v1970, 1.0
        %v1999 = vadd.f32 %v1972, 1.0
        %v2000 = vadd.f32 %v1974, 1.0
        %v2001 = vadd.f32 %v1976, 1.0
        %v2002 = vadd.f32 %v1978, 1.0
        %v2003 = vadd.f32 %v1980, 1.0
        %v2004 = vadd.f32 %v1982, 1.0
        %v2005 = vadd.f32 %v1984, 1.0
        %v2006 = vadd.f32 %v1986, 1.0
        %v2007 = vadd.f32 %v1988, 1.0
        %v2008 = vadd.f32 %v1990, 1.0
        %v2009 = vadd.f32 %v1992, 1.0
        %v2010 = vadd.f32 %v1994, 1.0
        %v2011 = vrcp.pop %v1995
        %v2012 = vmul.f32 1.0, %v2011
        %v2013 = vrcp.pop %v1996
        %v2014 = vmul.f32 1.0, %v2013
        %v2015 = vrcp.pop %v1997
        %v2016 = vmul.f32 1.0, %v2015
        %v2017 = vrcp.pop %v1998
        %v2018 = vmul.f32 1.0, %v2017
        %v2019 = vrcp.pop %v1999
        %v2020 = vmul.f32 1.0, %v2019
        %v2021 = vrcp.pop %v2000
        %v2022 = vmul.f32 1.0, %v2021
        %v2023 = vrcp.pop %v2001
        %v2024 = vmul.f32 1.0, %v2023
        %v2025 = vrcp.pop %v2002
        %v2026 = vmul.f32 1.0, %v2025
        %v2027 = vrcp.pop %v2003
        %v2028 = vmul.f32 1.0, %v2027
        %v2029 = vrcp.pop %v2004
        %v2030 = vmul.f32 1.0, %v2029
        %v2031 = vrcp.pop %v2005
        %v2032 = vmul.f32 1.0, %v2031
        %v2033 = vrcp.pop %v2006
        %v2034 = vmul.f32 1.0, %v2033
        %v2035 = vrcp.pop %v2007
        %v2036 = vmul.f32 1.0, %v2035
        %v2037 = vrcp.pop %v2008
        %v2038 = vmul.f32 1.0, %v2037
        %v2039 = vrcp.pop %v2009
        %v2040 = vmul.f32 1.0, %v2039
        %v2041 = vrcp.pop %v2010
        %v2042 = vmul.f32 1.0, %v2041
        %2059 = vset.pattern.permute.xlu0 0
        %2060 = vperm.xlu0 %2059, %v2012
        %v2061 = vpop.permute.xlu0 %2060
        %2062 = vset.pattern.permute.xlu0 0
        %2063 = vperm.xlu0 %2062, %v2014
        %v2064 = vpop.permute.xlu0 %2063
        %2065 = vset.pattern.permute.xlu0 0
        %2066 = vperm.xlu0 %2065, %v2016
        %v2067 = vpop.permute.xlu0 %2066
        %2068 = vset.pattern.permute.xlu0 0
        %2069 = vperm.xlu0 %2068, %v2018
        %v2070 = vpop.permute.xlu0 %2069
        %2071 = vset.pattern.permute.xlu0 0
        %2072 = vperm.xlu0 %2071, %v2020
        %v2073 = vpop.permute.xlu0 %2072
        %2074 = vset.pattern.permute.xlu0 0
        %2075 = vperm.xlu0 %2074, %v2022
        %v2076 = vpop.permute.xlu0 %2075
        %2077 = vset.pattern.permute.xlu0 0
        %2078 = vperm.xlu0 %2077, %v2024
        %v2079 = vpop.permute.xlu0 %2078
        %2080 = vset.pattern.permute.xlu0 0
        %2081 = vperm.xlu0 %2080, %v2026
        %v2082 = vpop.permute.xlu0 %2081
        %2083 = vset.pattern.permute.xlu0 0
        %2084 = vperm.xlu0 %2083, %v2028
        %v2085 = vpop.permute.xlu0 %2084
        %2086 = vset.pattern.permute.xlu0 0
        %2087 = vperm.xlu0 %2086, %v2030
        %v2088 = vpop.permute.xlu0 %2087
        %2089 = vset.pattern.permute.xlu0 0
        %2090 = vperm.xlu0 %2089, %v2032
        %v2091 = vpop.permute.xlu0 %2090
        %2092 = vset.pattern.permute.xlu0 0
        %2093 = vperm.xlu0 %2092, %v2034
        %v2094 = vpop.permute.xlu0 %2093
        %2095 = vset.pattern.permute.xlu0 0
        %2096 = vperm.xlu0 %2095, %v2036
        %v2097 = vpop.permute.xlu0 %2096
        %2098 = vset.pattern.permute.xlu0 0
        %2099 = vperm.xlu0 %2098, %v2038
        %v2100 = vpop.permute.xlu0 %2099
        %2101 = vset.pattern.permute.xlu0 0
        %2102 = vperm.xlu0 %2101, %v2040
        %v2103 = vpop.permute.xlu0 %2102
        %2104 = vset.pattern.permute.xlu0 0
        %2105 = vperm.xlu0 %2104, %v2042
        %v2106 = vpop.permute.xlu0 %2105
        %v2107 = vlaneseq
        %v2108 = vshrl.u32 %v2107, 7
        %v2109 = vsub.s32 %v680, %v2108
        %v2110 = vrot.slane %v2061, %v2109
        %v2111 = vlaneseq
        %v2112 = vshrl.u32 %v2111, 7
        %v2113 = vsub.s32 %v685, %v2112
        %v2114 = vrot.slane %v2064, %v2113
        %v2115 = vsel %vm690, %v2114, %v2110
        %v2116 = vlaneseq
        %v2117 = vshrl.u32 %v2116, 7
        %v2118 = vsub.s32 %v680, %v2117
        %v2119 = vrot.slane %v2067, %v2118
        %v2120 = vlaneseq
        %v2121 = vshrl.u32 %v2120, 7
        %v2122 = vsub.s32 %v685, %v2121
        %v2123 = vrot.slane %v2070, %v2122
        %v2124 = vsel %vm690, %v2123, %v2119
        %v2125 = vlaneseq
        %v2126 = vshrl.u32 %v2125, 7
        %v2127 = vsub.s32 %v680, %v2126
        %v2128 = vrot.slane %v2073, %v2127
        %v2129 = vlaneseq
        %v2130 = vshrl.u32 %v2129, 7
        %v2131 = vsub.s32 %v685, %v2130
        %v2132 = vrot.slane %v2076, %v2131
        %v2133 = vsel %vm690, %v2132, %v2128
        %v2134 = vlaneseq
        %v2135 = vshrl.u32 %v2134, 7
        %v2136 = vsub.s32 %v680, %v2135
        %v2137 = vrot.slane %v2079, %v2136
        %v2138 = vlaneseq
        %v2139 = vshrl.u32 %v2138, 7
        %v2140 = vsub.s32 %v685, %v2139
        %v2141 = vrot.slane %v2082, %v2140
        %v2142 = vsel %vm690, %v2141, %v2137
        %v2143 = vlaneseq
        %v2144 = vshrl.u32 %v2143, 7
        %v2145 = vsub.s32 %v680, %v2144
        %v2146 = vrot.slane %v2085, %v2145
        %v2147 = vlaneseq
        %v2148 = vshrl.u32 %v2147, 7
        %v2149 = vsub.s32 %v685, %v2148
        %v2150 = vrot.slane %v2088, %v2149
        %v2151 = vsel %vm690, %v2150, %v2146
        %v2152 = vlaneseq
        %v2153 = vshrl.u32 %v2152, 7
        %v2154 = vsub.s32 %v680, %v2153
        %v2155 = vrot.slane %v2091, %v2154
        %v2156 = vlaneseq
        %v2157 = vshrl.u32 %v2156, 7
        %v2158 = vsub.s32 %v685, %v2157
        %v2159 = vrot.slane %v2094, %v2158
        %v2160 = vsel %vm690, %v2159, %v2155
        %v2161 = vlaneseq
        %v2162 = vshrl.u32 %v2161, 7
        %v2163 = vsub.s32 %v680, %v2162
        %v2164 = vrot.slane %v2097, %v2163
        %v2165 = vlaneseq
        %v2166 = vshrl.u32 %v2165, 7
        %v2167 = vsub.s32 %v685, %v2166
        %v2168 = vrot.slane %v2100, %v2167
        %v2169 = vsel %vm690, %v2168, %v2164
        %v2170 = vlaneseq
        %v2171 = vshrl.u32 %v2170, 7
        %v2172 = vsub.s32 %v680, %v2171
        %v2173 = vrot.slane %v2103, %v2172
        %v2174 = vlaneseq
        %v2175 = vshrl.u32 %v2174, 7
        %v2176 = vsub.s32 %v685, %v2175
        %v2177 = vrot.slane %v2106, %v2176
        %v2178 = vsel %vm690, %v2177, %v2173
        %v2187 = vmul.f32 %v172, %v2115
        %v2188 = vmul.f32 %v181, %v2124
        %v2189 = vmul.f32 %v190, %v2133
        %v2190 = vmul.f32 %v199, %v2142
        %v2191 = vmul.f32 %v208, %v2151
        %v2192 = vmul.f32 %v217, %v2160
        %v2193 = vmul.f32 %v226, %v2169
        %v2194 = vmul.f32 %v235, %v2178
        %vm2195 = vcmask 122880
        %v2196 = vsel %vm2195, %v2187, 0.0
        %2197 = vadd.xlane.f32.xlu0 %v2196
        %v2198 = vpop.xlane.xlu0 %2197
        %v2199 = vsel %vm2195, %v2188, 0.0
        %2200 = vadd.xlane.f32.xlu0 %v2199
        %v2201 = vpop.xlane.xlu0 %2200
        %v2202 = vsel %vm2195, %v2189, 0.0
        %2203 = vadd.xlane.f32.xlu0 %v2202
        %v2204 = vpop.xlane.xlu0 %2203
        %v2205 = vsel %vm2195, %v2190, 0.0
        %2206 = vadd.xlane.f32.xlu0 %v2205
        %v2207 = vpop.xlane.xlu0 %2206
        %v2208 = vsel %vm2195, %v2191, 0.0
        %2209 = vadd.xlane.f32.xlu0 %v2208
        %v2210 = vpop.xlane.xlu0 %2209
        %v2211 = vsel %vm2195, %v2192, 0.0
        %2212 = vadd.xlane.f32.xlu0 %v2211
        %v2213 = vpop.xlane.xlu0 %2212
        %v2214 = vsel %vm2195, %v2193, 0.0
        %2215 = vadd.xlane.f32.xlu0 %v2214
        %v2216 = vpop.xlane.xlu0 %2215
        %v2217 = vsel %vm2195, %v2194, 0.0
        %2218 = vadd.xlane.f32.xlu0 %v2217
        %v2219 = vpop.xlane.xlu0 %2218
        %v2220 = vrot.slane %v172, 5
        %v2221 = vrot.slane %v181, 5
        %v2222 = vrot.slane %v190, 5
        %v2223 = vrot.slane %v199, 5
        %v2224 = vrot.slane %v208, 5
        %v2225 = vrot.slane %v217, 5
        %v2226 = vrot.slane %v226, 5
        %v2227 = vrot.slane %v235, 5
        %v2236 = vadd.f32 %v2198, %v2220
        %v2237 = vadd.f32 %v2201, %v2221
        %v2238 = vadd.f32 %v2204, %v2222
        %v2239 = vadd.f32 %v2207, %v2223
        %v2240 = vadd.f32 %v2210, %v2224
        %v2241 = vadd.f32 %v2213, %v2225
        %v2242 = vadd.f32 %v2216, %v2226
        %v2243 = vadd.f32 %v2219, %v2227
        %v2252 = vrot.slane %v2237, 7
        %v2253 = vsel %vm755, %v2252, %v2236
        %v2254 = vrot.slane %v2238, 6
        %v2255 = vsel %vm756, %v2254, %v2253
        %v2256 = vrot.slane %v2239, 5
        %v2257 = vsel %vm758, %v2256, %v2255
        %v2258 = vrot.slane %v2240, 4
        %v2259 = vsel %vm760, %v2258, %v2257
        %v2260 = vrot.slane %v2241, 3
        %v2261 = vsel %vm762, %v2260, %v2259
        %v2262 = vrot.slane %v2242, 2
        %v2263 = vsel %vm764, %v2262, %v2261
        %v2264 = vrot.slane %v2243, 1
        %v2265 = vsel %vm766, %v2264, %v2263
        %2267 = vxpose.xlu0.b32.start [1/16] %v2265, 128
        %2268 = vxpose.xlu0.b32.cont [2/16] 0.0, 128
        %2269 = vxpose.xlu0.b32.cont [3/16] 0.0, 128
        %2270 = vxpose.xlu0.b32.cont [4/16] 0.0, 128
        %2271 = vxpose.xlu0.b32.cont [5/16] 0.0, 128
        %2272 = vxpose.xlu0.b32.cont [6/16] 0.0, 128
        %2273 = vxpose.xlu0.b32.cont [7/16] 0.0, 128
        %2274 = vxpose.xlu0.b32.cont [8/16] 0.0, 128
        %2275 = vxpose.xlu0.b32.cont [9/16] 0.0, 128
        %2276 = vxpose.xlu0.b32.cont [10/16] 0.0, 128
        %2277 = vxpose.xlu0.b32.cont [11/16] 0.0, 128
        %2278 = vxpose.xlu0.b32.cont [12/16] 0.0, 128
        %2279 = vxpose.xlu0.b32.cont [13/16] 0.0, 128
        %2280 = vxpose.xlu0.b32.cont [14/16] 0.0, 128
        %2281 = vxpose.xlu0.b32.cont [15/16] 0.0, 128
        %2282 = vxpose.xlu0.b32.end [16/16] 0.0, 128
        %v2283 = vpop.trf.xlu0
        %v2284 = vpop.trf.xlu0
        %v2285 = vpop.trf.xlu0
        %v2286 = vpop.trf.xlu0
        %v2287 = vpop.trf.xlu0
        %v2288 = vpop.trf.xlu0
        %v2289 = vpop.trf.xlu0
        %v2290 = vpop.trf.xlu0
        %v2291 = vpop.trf.xlu0
        %v2292 = vpop.trf.xlu0
        %v2293 = vpop.trf.xlu0
        %v2294 = vpop.trf.xlu0
        %v2295 = vpop.trf.xlu0
        %v2296 = vpop.trf.xlu0
        %v2297 = vpop.trf.xlu0
        %v2298 = vpop.trf.xlu0
        %vm2299 = vcmask 57344
        %2300 = vst.msk [vmem:[%s151] sm:$0x1] %vm2299, %v2283
        %s2301 = sand.u32 %s76, 1
        %s2302 = scalar_lea.sflag [#allocation3], %s2301
        %s2303 = sand.u32 %s76, 1
        %s2304 = scalar_lea.vmem [#allocation2], %s2303
        // Predicated region
        $region29: #{tpu_custom_call.1} parent=27 // pred_check
          %p2305 = pneg %p86
        $region30: #{tpu_custom_call.1} parent=27 // pred_check_branch
          %2307 = sbr.rel (%p2305) target = $region32
        $region31: #{tpu_custom_call.1} parent=27 // pred_region
          %s2309 = ssub.s32 16, 16
          %2310 = vsyncadd %s2302, %s2309
          %s2311 = smul.addr %s16, 16
          %s2312 = scalar_lea.hbm %s2, %s2311
          %s2314 = sshll.u32 %s2304, 4
          %s2315 = int_to_ptr.vmem [resolvable:$true] %s2314
          %2317 = dma.vmem_to_hbm [thread:$0]  %s2315, 16, %s2312, %s2302
        $region32: #{tpu_custom_call.1} parent=27 // pred_fallthru
          _
      $region28: #{tpu_custom_call.1} parent=5 // pred_fallthru
        _
      %p2318 = scmp.le.s32.totalorder 2, %s11
      // Predicated region
      $region33: #{tpu_custom_call.1} parent=5 // pred_check
        %p2319 = pneg %p2318
      $region34: #{tpu_custom_call.1} parent=5 // pred_check_branch
        %2321 = sbr.rel (%p2319) target = $region36
      $region35: #{tpu_custom_call.1} parent=5 // pred_region
        %s2322 = ssub.s32 %s11, 2
        // Predicated region
        $region37: #{tpu_custom_call.1} parent=35 // pred_check
          %p2323 = pneg %p92
        $region38: #{tpu_custom_call.1} parent=35 // pred_check_branch
          %2325 = sbr.rel (%p2323) target = $region40
        $region39: #{tpu_custom_call.1} parent=35 // pred_region
          %s2326 = sand.u32 %s77, 1
          %s2327 = scalar_lea.sflag [#allocation3], %s2326
          %s2328 = sand.u32 %s77, 1
          %s2329 = scalar_lea.vmem [#allocation2], %s2328
          %2330 = dma.done %s2327, 16
        $region40: #{tpu_custom_call.1} parent=35 // pred_fallthru
          _
      $region36: #{tpu_custom_call.1} parent=5 // pred_fallthru
        _
    $region6: #{tpu_custom_call.1} parent=1 // loop_footer
      %s15 = sadd.s32 1, %s11
    $region7: #{tpu_custom_call.1} parent=1 // loop_footer_branch
      %10 = sbr.rel target = $region3
    $region8: #{tpu_custom_call.1} parent=1 // loop_exit
      _
    %2331 = vsyncpa [#allocation3], 1
    %s2332 = scalar_lea.sflag [#allocation3], 1
    %2333 = vsyncpa %s2332, 1

</llo_original>
